<compile_context>
chip_gen: v7x
topology: tpu7x:2x2x1
jax: 0.10.0
libtpu: 0.0.40
codegen_flags: <defaults>
</compile_context>

<pallas_src>
import jax
import jax.numpy as jnp
from jax.experimental import pallas as pl
from jax.experimental.pallas import tpu as pltpu


def _round_up(x, m):
    return (x + m - 1) // m * m


def _gelu_exact(x):
    # PyTorch nn.GELU() default is the exact erf formulation.
    return 0.5 * x * (1.0 + jax.lax.erf(x * (1.0 / jnp.sqrt(2.0))))


def encoder_head_kernel(x_ref, w1_ref, b1_ref, w2_ref, b2_ref, w3_ref, b3_ref, out_ref):
    bf16 = jnp.bfloat16
    x = x_ref[...].astype(bf16)                                       # [TB, E_pad]

    h1 = jnp.dot(x, w1_ref[...], preferred_element_type=jnp.float32) + b1_ref[...]
    h1 = _gelu_exact(h1)                                              # [TB, H] f32

    h2 = jnp.dot(h1.astype(bf16), w2_ref[...],
                 preferred_element_type=jnp.float32) + b2_ref[...]
    h2 = _gelu_exact(h2)                                              # [TB, L_pad] f32 (pad cols stay 0)

    out = jnp.dot(h2.astype(bf16), w3_ref[...],
                  preferred_element_type=jnp.float32) + b3_ref[...]
    out_ref[...] = out.astype(out_ref.dtype)                          # [TB, L_pad]


def _vmem_budget_bytes():
    """Per-generation scoped-VMEM budget (review item 3)."""
    try:
        cap = int(pltpu.get_tpu_info().vmem_capacity_bytes)
    except Exception:
        cap = 64 << 20                                                # conservative (v7x-sized) fallback
    return int(max(16 << 20, min(cap - (8 << 20), 100 << 20)))


def encoder_head(encoded_pcl, params, *, tb=256):
    """encoded_pcl: [B, N, D] (f32 or bf16). params: dict of w1,b1,w2,b2,w3,b3 ([in,out])."""
    B, N, D = encoded_pcl.shape
    if N < 2:
        raise ValueError("EncoderHead requires at least 2 tokens (max over tokens 1:).")

    w1, b1 = params["w1"], params["b1"]
    w2, b2 = params["w2"], params["b2"]
    w3, b3 = params["w3"], params["b3"]
    E, H = w1.shape
    assert E == 2 * D, "encoded_dim must equal 2 * per-token feature dim"
    latent_dim = w3.shape[1]

    # --- XLA-side pre-reduction (perf review item 2b) ----------------------
    # cat([tok0, max(tok 1:)]) is a cheap fused reduce in XLA; the kernel then
    # sees a single [B, 2D] slab, so its input block no longer scales with N.
    x_dtype = jnp.bfloat16 if encoded_pcl.dtype == jnp.bfloat16 else jnp.float32
    x = jnp.concatenate(
        [encoded_pcl[:, 0], jnp.max(encoded_pcl[:, 1:], axis=1)], axis=-1
    ).astype(x_dtype)                                                 # [B, E]

    # --- wrapper-side layout plumbing --------------------------------------
    E_pad = _round_up(E, 128)                                         # lane-dense input slab
    L_pad = _round_up(latent_dim, 128)                                # lane-dense output stores

    bf16 = jnp.bfloat16
    w1p = jnp.zeros((E_pad, H), bf16).at[:E, :].set(w1.astype(bf16))
    b1r = b1.reshape(1, H).astype(jnp.float32)
    w2p = jnp.zeros((H, L_pad), bf16).at[:, :latent_dim].set(w2.astype(bf16))
    b2p = jnp.zeros((1, L_pad), jnp.float32).at[:, :latent_dim].set(b2.astype(jnp.float32))
    w3p = jnp.zeros((L_pad, L_pad), bf16).at[:latent_dim, :latent_dim].set(w3.astype(bf16))
    b3p = jnp.zeros((1, L_pad), jnp.float32).at[:, :latent_dim].set(b3.astype(jnp.float32))

    # --- batch tile selection (per-generation VMEM budget, review items 1,3,4,7,8)
    x_bytes = 2 if x_dtype == jnp.bfloat16 else 4
    w_bytes = (E_pad * H + H * L_pad + L_pad * L_pad) * 2 + (H + 2 * L_pad) * 4  # single-buffered

    def vmem_need(tb_):
        in_b = 2 * tb_ * E_pad * x_bytes                              # double-buffered input
        out_b = 2 * tb_ * L_pad * 4                                   # double-buffered output
        inter = 2 * tb_ * (H + 2 * L_pad) * 4                         # f32 h1/h2 + working copies
        return in_b + out_b + w_bytes + inter + (4 << 20)             # + headroom

    budget = _vmem_budget_bytes()

    b8 = _round_up(B, 8)
    tb = max(8, min(tb, b8))
    # Megacore (review item 7): if the whole batch fits a single tile but spans
    # more than one sublane group, split so the grid has >= 2 parallel steps.
    if b8 >= 16 and b8 <= tb:
        tb = _round_up(pl.cdiv(b8, 2), 8)
    while tb > 8 and vmem_need(tb) > budget:
        tb = max(8, _round_up(tb // 2, 8))

    B_pad = _round_up(B, tb)
    x = jnp.pad(x, ((0, B_pad - B), (0, E_pad - E)))
    grid = (B_pad // tb,)

    cost = pl.CostEstimate(
        flops=2 * B_pad * (E_pad * H + H * L_pad + L_pad * L_pad),
        transcendentals=B_pad * (H + L_pad),
        bytes_accessed=int(B_pad * E_pad * x_bytes + w_bytes + B_pad * L_pad * 4),
    )

    def build_call(single_buffer_weights):
        def resident(shape):
            index_map = lambda i: (0,) * len(shape)
            if single_buffer_weights:
                # Constant block index -> one VMEM buffer is enough (item 1).
                return pl.BlockSpec(shape, index_map, pipeline_mode=pl.Buffered(1))
            return pl.BlockSpec(shape, index_map)

        return pl.pallas_call(
            encoder_head_kernel,
            out_shape=jax.ShapeDtypeStruct((B_pad, L_pad), jnp.float32),
            grid_spec=pltpu.PrefetchScalarGridSpec(
                num_scalar_prefetch=0,
                grid=grid,
                in_specs=[
                    pl.BlockSpec((tb, E_pad), lambda i: (i, 0)),      # input: batch-tiled
                    resident((E_pad, H)),                             # w1 (VMEM-resident)
                    resident((1, H)),                                 # b1
                    resident((H, L_pad)),                             # w2
                    resident((1, L_pad)),                             # b2
                    resident((L_pad, L_pad)),                         # w3
                    resident((1, L_pad)),                             # b3
                ],
                out_specs=pl.BlockSpec((tb, L_pad), lambda i: (i, 0)),
            ),
            compiler_params=pltpu.CompilerParams(
                dimension_semantics=("parallel",),
                vmem_limit_bytes=budget,
            ),
            cost_estimate=cost,
        )

    args = (x, w1p, b1r, w2p, b2p, w3p, b3p)
    use_single = hasattr(pl, "Buffered")
    try:
        out_padded = build_call(use_single)(*args)
    except Exception:
        if not use_single:
            raise
        # Fallback: default double-buffering if single-buffered weight blocks
        # are rejected by this jax/Mosaic version.
        out_padded = build_call(False)(*args)

    return out_padded[:B, :latent_dim]


def init_params(key, encoded_dim, latent_dim):
    """Deterministic synthetic weights, PyTorch-nn.Linear-like uniform init ([in, out])."""
    def linear(k, fan_in, fan_out):
        kw, kb = jax.random.split(k)
        bound = 1.0 / jnp.sqrt(fan_in)
        w = jax.random.uniform(kw, (fan_in, fan_out), jnp.float32, -bound, bound)
        b = jax.random.uniform(kb, (fan_out,), jnp.float32, -bound, bound)
        return w, b

    k1, k2, k3 = jax.random.split(key, 3)
    w1, b1 = linear(k1, encoded_dim, 1024)
    w2, b2 = linear(k2, 1024, latent_dim)
    w3, b3 = linear(k3, latent_dim, latent_dim)
    return {"w1": w1, "b1": b1, "w2": w2, "b2": b2, "w3": w3, "b3": b3}


def encoder_head_ref(encoded_pcl, params):
    """Pure-JAX full-f32 reference (matches the PyTorch module exactly)."""
    x = jnp.concatenate(
        [encoded_pcl[:, 0], jnp.max(encoded_pcl[:, 1:], axis=1)], axis=-1)
    h = _gelu_exact(x @ params["w1"] + params["b1"])
    h = _gelu_exact(h @ params["w2"] + params["b2"])
    return h @ params["w3"] + params["b3"]


def encoder_head_ref_bf16(encoded_pcl, params):
    """Pure-JAX reference using the same precision recipe as the kernel
    (bf16 matmul operands, f32 accumulation)."""
    def mm(a, w):
        return jnp.dot(a.astype(jnp.bfloat16), w.astype(jnp.bfloat16),
                       preferred_element_type=jnp.float32)
    x = jnp.concatenate(
        [encoded_pcl[:, 0], jnp.max(encoded_pcl[:, 1:], axis=1)], axis=-1)
    h = _gelu_exact(mm(x, params["w1"]) + params["b1"])
    h = _gelu_exact(mm(h, params["w2"]) + params["b2"])
    return mm(h, params["w3"]) + params["b3"]


if __name__ == "__main__":
    # Small shapes: batch=2, tokens=8, per-token feature D=16
    #   => encoded_dim = 2*D = 32, latent_dim = 32.
    B, N, D = 2, 8, 16
    encoded_dim, latent_dim = 2 * D, 32

    key = jax.random.PRNGKey(0)
    k_x, k_p, k_x2 = jax.random.split(key, 3)
    encoded_pcl = jax.random.normal(k_x, (B, N, D), dtype=jnp.float32)
    params = init_params(k_p, encoded_dim, latent_dim)

    out = encoder_head(encoded_pcl, params)
    out = jax.block_until_ready(out)
    assert out.shape == (B, latent_dim)

    # Tight check against a reference with matching (bf16-matmul / f32-accum) precision.
    ref_bf16 = encoder_head_ref_bf16(encoded_pcl, params)
    assert jnp.allclose(out, ref_bf16, atol=1e-4, rtol=1e-4), "mismatch vs bf16-precision reference"

    # Loose check against the exact f32 PyTorch-equivalent reference
    # (bf16 MXU operands cost a few 1e-3 of absolute error at these magnitudes).
    ref_f32 = encoder_head_ref(encoded_pcl, params)
    assert jnp.allclose(out, ref_f32, atol=2e-2, rtol=2e-2), "mismatch vs f32 reference"

    # Second case: larger batch to exercise a multi-step (megacore-split) grid.
    B2 = 24
    encoded_pcl2 = jax.random.normal(k_x2, (B2, N, D), dtype=jnp.float32)
    out2 = jax.block_until_ready(encoder_head(encoded_pcl2, params))
    assert out2.shape == (B2, latent_dim)
    assert jnp.allclose(out2, encoder_head_ref_bf16(encoded_pcl2, params),
                        atol=1e-4, rtol=1e-4), "mismatch vs bf16-precision reference (B=24)"
    assert jnp.allclose(out2, encoder_head_ref(encoded_pcl2, params),
                        atol=2e-2, rtol=2e-2), "mismatch vs f32 reference (B=24)"

    print("KERNEL_OK")
</pallas_src>

<mosaic_0001>
module attributes {stable_mosaic.version = 11 : i64} {
  func.func @encoder_head_kernel(%arg0: i32, %arg1: memref<8x128xf32, #tpu.memory_space<vmem>>, %arg2: memref<128x1024xbf16, #tpu.memory_space<vmem>>, %arg3: memref<1x1024xf32, #tpu.memory_space<vmem>>, %arg4: memref<1024x128xbf16, #tpu.memory_space<vmem>>, %arg5: memref<1x128xf32, #tpu.memory_space<vmem>>, %arg6: memref<128x128xbf16, #tpu.memory_space<vmem>>, %arg7: memref<1x128xf32, #tpu.memory_space<vmem>>, %arg8: memref<8x128xf32, #tpu.memory_space<vmem>>) attributes {dimension_semantics = [#tpu.dimension_semantics<parallel>], iteration_bounds = array<i64: 1>, scalar_prefetch = 0 : i64, scratch_operands = 0 : i64, tpu.core_type = #tpu.core_type<tc>, window_params = [{transform_indices = @transform_0, window_bounds = array<i64: 8, 128>}, {pipeline_mode = #tpu.pipeline_mode<synchronous>, transform_indices = @transform_1, window_bounds = array<i64: 128, 1024>}, {pipeline_mode = #tpu.pipeline_mode<synchronous>, transform_indices = @transform_2, window_bounds = array<i64: 1, 1024>}, {pipeline_mode = #tpu.pipeline_mode<synchronous>, transform_indices = @transform_3, window_bounds = array<i64: 1024, 128>}, {pipeline_mode = #tpu.pipeline_mode<synchronous>, transform_indices = @transform_4, window_bounds = array<i64: 1, 128>}, {pipeline_mode = #tpu.pipeline_mode<synchronous>, transform_indices = @transform_5, window_bounds = array<i64: 128, 128>}, {pipeline_mode = #tpu.pipeline_mode<synchronous>, transform_indices = @transform_6, window_bounds = array<i64: 1, 128>}, {transform_indices = @transform_7, window_bounds = array<i64: 8, 128>}]} {
    %c0 = arith.constant 0 : index
    %c0_0 = arith.constant 0 : index
    %0 = vector.load %arg1[%c0, %c0_0] : memref<8x128xf32, #tpu.memory_space<vmem>>, vector<8x128xf32>
    %1 = arith.truncf %0 : vector<8x128xf32> to vector<8x128xbf16>
    %c0_1 = arith.constant 0 : index
    %c0_2 = arith.constant 0 : index
    %2 = vector.load %arg2[%c0_1, %c0_2] : memref<128x1024xbf16, #tpu.memory_space<vmem>>, vector<128x1024xbf16>
    %cst = arith.constant dense<0.000000e+00> : vector<8x1024xf32>
    %3 = tpu.matmul %1, %2, %cst {dimension_numbers = #tpu.dot_dimension_numbers<[1], [0], [0], [1], [0, 0, 1, 1], [], []>} : vector<8x128xbf16>, vector<128x1024xbf16>, vector<8x1024xf32> -> vector<8x1024xf32>
    %c0_3 = arith.constant 0 : index
    %c0_4 = arith.constant 0 : index
    %4 = vector.load %arg3[%c0_3, %c0_4] : memref<1x1024xf32, #tpu.memory_space<vmem>>, vector<1x1024xf32>
    %5 = vector.broadcast %4 : vector<1x1024xf32> to vector<8x1024xf32>
    %6 = arith.addf %3, %5 : vector<8x1024xf32>
    %cst_5 = arith.constant 5.000000e-01 : f32
    %7 = vector.broadcast %cst_5 : f32 to vector<8x1024xf32>
    %8 = arith.mulf %7, %6 : vector<8x1024xf32>
    %cst_6 = arith.constant 2.000000e+00 : f32
    %9 = math.sqrt %cst_6 : f32
    %cst_7 = arith.constant 1.000000e+00 : f32
    %10 = arith.divf %cst_7, %9 : f32
    %11 = vector.broadcast %10 : f32 to vector<8x1024xf32>
    %12 = arith.mulf %6, %11 : vector<8x1024xf32>
    %13 = math.erf %12 : vector<8x1024xf32>
    %cst_8 = arith.constant 1.000000e+00 : f32
    %14 = vector.broadcast %cst_8 : f32 to vector<8x1024xf32>
    %15 = arith.addf %14, %13 : vector<8x1024xf32>
    %16 = arith.mulf %8, %15 : vector<8x1024xf32>
    %17 = arith.truncf %16 : vector<8x1024xf32> to vector<8x1024xbf16>
    %c0_9 = arith.constant 0 : index
    %c0_10 = arith.constant 0 : index
    %18 = vector.load %arg4[%c0_9, %c0_10] : memref<1024x128xbf16, #tpu.memory_space<vmem>>, vector<1024x128xbf16>
    %cst_11 = arith.constant dense<0.000000e+00> : vector<8x128xf32>
    %19 = tpu.matmul %17, %18, %cst_11 {dimension_numbers = #tpu.dot_dimension_numbers<[1], [0], [0], [1], [0, 0, 1, 1], [], []>} : vector<8x1024xbf16>, vector<1024x128xbf16>, vector<8x128xf32> -> vector<8x128xf32>
    %c0_12 = arith.constant 0 : index
    %c0_13 = arith.constant 0 : index
    %20 = vector.load %arg5[%c0_12, %c0_13] : memref<1x128xf32, #tpu.memory_space<vmem>>, vector<1x128xf32>
    %21 = vector.broadcast %20 : vector<1x128xf32> to vector<8x128xf32>
    %22 = arith.addf %19, %21 : vector<8x128xf32>
    %cst_14 = arith.constant 5.000000e-01 : f32
    %23 = vector.broadcast %cst_14 : f32 to vector<8x128xf32>
    %24 = arith.mulf %23, %22 : vector<8x128xf32>
    %cst_15 = arith.constant 2.000000e+00 : f32
    %25 = math.sqrt %cst_15 : f32
    %cst_16 = arith.constant 1.000000e+00 : f32
    %26 = arith.divf %cst_16, %25 : f32
    %27 = vector.broadcast %26 : f32 to vector<8x128xf32>
    %28 = arith.mulf %22, %27 : vector<8x128xf32>
    %29 = math.erf %28 : vector<8x128xf32>
    %cst_17 = arith.constant 1.000000e+00 : f32
    %30 = vector.broadcast %cst_17 : f32 to vector<8x128xf32>
    %31 = arith.addf %30, %29 : vector<8x128xf32>
    %32 = arith.mulf %24, %31 : vector<8x128xf32>
    %33 = arith.truncf %32 : vector<8x128xf32> to vector<8x128xbf16>
    %c0_18 = arith.constant 0 : index
    %c0_19 = arith.constant 0 : index
    %34 = vector.load %arg6[%c0_18, %c0_19] : memref<128x128xbf16, #tpu.memory_space<vmem>>, vector<128x128xbf16>
    %cst_20 = arith.constant dense<0.000000e+00> : vector<8x128xf32>
    %35 = tpu.matmul %33, %34, %cst_20 {dimension_numbers = #tpu.dot_dimension_numbers<[1], [0], [0], [1], [0, 0, 1, 1], [], []>} : vector<8x128xbf16>, vector<128x128xbf16>, vector<8x128xf32> -> vector<8x128xf32>
    %c0_21 = arith.constant 0 : index
    %c0_22 = arith.constant 0 : index
    %36 = vector.load %arg7[%c0_21, %c0_22] : memref<1x128xf32, #tpu.memory_space<vmem>>, vector<1x128xf32>
    %37 = vector.broadcast %36 : vector<1x128xf32> to vector<8x128xf32>
    %38 = arith.addf %35, %37 : vector<8x128xf32>
    %c0_23 = arith.constant 0 : index
    %c0_24 = arith.constant 0 : index
    %39 = vector.load %arg8[%c0_23, %c0_24] : memref<8x128xf32, #tpu.memory_space<vmem>>, vector<8x128xf32>
    tpu.vector_store %arg8[%c0_23, %c0_24], %38 {strides = array<i32>} : memref<8x128xf32, #tpu.memory_space<vmem>>, vector<8x128xf32>,
    return
  }
  func.func @transform_0(%arg0: i32) -> (i32, i32) {
    %c0_i32 = arith.constant 0 : i32
    %c0_i32_0 = arith.constant 0 : i32
    return %arg0, %c0_i32 : i32, i32
  }
  func.func @transform_1(%arg0: i32) -> (i32, i32) {
    %c0_i32 = arith.constant 0 : i32
    %c0_i32_0 = arith.constant 0 : i32
    %c0_i32_1 = arith.constant 0 : i32
    return %c0_i32, %c0_i32_0 : i32, i32
  }
  func.func @transform_2(%arg0: i32) -> (i32, i32) {
    %c0_i32 = arith.constant 0 : i32
    %c0_i32_0 = arith.constant 0 : i32
    %c0_i32_1 = arith.constant 0 : i32
    return %c0_i32, %c0_i32_0 : i32, i32
  }
  func.func @transform_3(%arg0: i32) -> (i32, i32) {
    %c0_i32 = arith.constant 0 : i32
    %c0_i32_0 = arith.constant 0 : i32
    %c0_i32_1 = arith.constant 0 : i32
    return %c0_i32, %c0_i32_0 : i32, i32
  }
  func.func @transform_4(%arg0: i32) -> (i32, i32) {
    %c0_i32 = arith.constant 0 : i32
    %c0_i32_0 = arith.constant 0 : i32
    %c0_i32_1 = arith.constant 0 : i32
    return %c0_i32, %c0_i32_0 : i32, i32
  }
  func.func @transform_5(%arg0: i32) -> (i32, i32) {
    %c0_i32 = arith.constant 0 : i32
    %c0_i32_0 = arith.constant 0 : i32
    %c0_i32_1 = arith.constant 0 : i32
    return %c0_i32, %c0_i32_0 : i32, i32
  }
  func.func @transform_6(%arg0: i32) -> (i32, i32) {
    %c0_i32 = arith.constant 0 : i32
    %c0_i32_0 = arith.constant 0 : i32
    %c0_i32_1 = arith.constant 0 : i32
    return %c0_i32, %c0_i32_0 : i32, i32
  }
  func.func @transform_7(%arg0: i32) -> (i32, i32) {
    %c0_i32 = arith.constant 0 : i32
    %c0_i32_0 = arith.constant 0 : i32
    return %arg0, %c0_i32 : i32, i32
  }
}

module attributes {stable_mosaic.version = 11 : i64} {
  func.func @encoder_head_kernel(%arg0: i32, %arg1: memref<8x128xf32, #tpu.memory_space<vmem>>, %arg2: memref<128x1024xbf16, #tpu.memory_space<vmem>>, %arg3: memref<1x1024xf32, #tpu.memory_space<vmem>>, %arg4: memref<1024x128xbf16, #tpu.memory_space<vmem>>, %arg5: memref<1x128xf32, #tpu.memory_space<vmem>>, %arg6: memref<128x128xbf16, #tpu.memory_space<vmem>>, %arg7: memref<1x128xf32, #tpu.memory_space<vmem>>, %arg8: memref<8x128xf32, #tpu.memory_space<vmem>>) attributes {dimension_semantics = [#tpu.dimension_semantics<parallel>], iteration_bounds = array<i64: 1>, scalar_prefetch = 0 : i64, scratch_operands = 0 : i64, tpu.core_type = #tpu.core_type<tc>, window_params = [{transform_indices = @transform_0, window_bounds = array<i64: 8, 128>}, {pipeline_mode = #tpu.pipeline_mode<synchronous>, transform_indices = @transform_1, window_bounds = array<i64: 128, 1024>}, {pipeline_mode = #tpu.pipeline_mode<synchronous>, transform_indices = @transform_2, window_bounds = array<i64: 1, 1024>}, {pipeline_mode = #tpu.pipeline_mode<synchronous>, transform_indices = @transform_3, window_bounds = array<i64: 1024, 128>}, {pipeline_mode = #tpu.pipeline_mode<synchronous>, transform_indices = @transform_4, window_bounds = array<i64: 1, 128>}, {pipeline_mode = #tpu.pipeline_mode<synchronous>, transform_indices = @transform_5, window_bounds = array<i64: 128, 128>}, {pipeline_mode = #tpu.pipeline_mode<synchronous>, transform_indices = @transform_6, window_bounds = array<i64: 1, 128>}, {transform_indices = @transform_7, window_bounds = array<i64: 8, 128>}]} {
    %c0 = arith.constant 0 : index
    %c0_0 = arith.constant 0 : index
    %0 = vector.load %arg1[%c0, %c0_0] : memref<8x128xf32, #tpu.memory_space<vmem>>, vector<8x128xf32>
    %1 = arith.truncf %0 : vector<8x128xf32> to vector<8x128xbf16>
    %c0_1 = arith.constant 0 : index
    %c0_2 = arith.constant 0 : index
    %2 = vector.load %arg2[%c0_1, %c0_2] : memref<128x1024xbf16, #tpu.memory_space<vmem>>, vector<128x1024xbf16>
    %cst = arith.constant dense<0.000000e+00> : vector<8x1024xf32>
    %3 = tpu.matmul %1, %2, %cst {dimension_numbers = #tpu.dot_dimension_numbers<[1], [0], [0], [1], [0, 0, 1, 1], [], []>} : vector<8x128xbf16>, vector<128x1024xbf16>, vector<8x1024xf32> -> vector<8x1024xf32>
    %c0_3 = arith.constant 0 : index
    %c0_4 = arith.constant 0 : index
    %4 = vector.load %arg3[%c0_3, %c0_4] : memref<1x1024xf32, #tpu.memory_space<vmem>>, vector<1x1024xf32>
    %5 = vector.broadcast %4 : vector<1x1024xf32> to vector<8x1024xf32>
    %6 = arith.addf %3, %5 : vector<8x1024xf32>
    %cst_5 = arith.constant 5.000000e-01 : f32
    %7 = vector.broadcast %cst_5 : f32 to vector<8x1024xf32>
    %8 = arith.mulf %7, %6 : vector<8x1024xf32>
    %cst_6 = arith.constant 2.000000e+00 : f32
    %9 = math.sqrt %cst_6 : f32
    %cst_7 = arith.constant 1.000000e+00 : f32
    %10 = arith.divf %cst_7, %9 : f32
    %11 = vector.broadcast %10 : f32 to vector<8x1024xf32>
    %12 = arith.mulf %6, %11 : vector<8x1024xf32>
    %13 = math.erf %12 : vector<8x1024xf32>
    %cst_8 = arith.constant 1.000000e+00 : f32
    %14 = vector.broadcast %cst_8 : f32 to vector<8x1024xf32>
    %15 = arith.addf %14, %13 : vector<8x1024xf32>
    %16 = arith.mulf %8, %15 : vector<8x1024xf32>
    %17 = arith.truncf %16 : vector<8x1024xf32> to vector<8x1024xbf16>
    %c0_9 = arith.constant 0 : index
    %c0_10 = arith.constant 0 : index
    %18 = vector.load %arg4[%c0_9, %c0_10] : memref<1024x128xbf16, #tpu.memory_space<vmem>>, vector<1024x128xbf16>
    %cst_11 = arith.constant dense<0.000000e+00> : vector<8x128xf32>
    %19 = tpu.matmul %17, %18, %cst_11 {dimension_numbers = #tpu.dot_dimension_numbers<[1], [0], [0], [1], [0, 0, 1, 1], [], []>} : vector<8x1024xbf16>, vector<1024x128xbf16>, vector<8x128xf32> -> vector<8x128xf32>
    %c0_12 = arith.constant 0 : index
    %c0_13 = arith.constant 0 : index
    %20 = vector.load %arg5[%c0_12, %c0_13] : memref<1x128xf32, #tpu.memory_space<vmem>>, vector<1x128xf32>
    %21 = vector.broadcast %20 : vector<1x128xf32> to vector<8x128xf32>
    %22 = arith.addf %19, %21 : vector<8x128xf32>
    %cst_14 = arith.constant 5.000000e-01 : f32
    %23 = vector.broadcast %cst_14 : f32 to vector<8x128xf32>
    %24 = arith.mulf %23, %22 : vector<8x128xf32>
    %cst_15 = arith.constant 2.000000e+00 : f32
    %25 = math.sqrt %cst_15 : f32
    %cst_16 = arith.constant 1.000000e+00 : f32
    %26 = arith.divf %cst_16, %25 : f32
    %27 = vector.broadcast %26 : f32 to vector<8x128xf32>
    %28 = arith.mulf %22, %27 : vector<8x128xf32>
    %29 = math.erf %28 : vector<8x128xf32>
    %cst_17 = arith.constant 1.000000e+00 : f32
    %30 = vector.broadcast %cst_17 : f32 to vector<8x128xf32>
    %31 = arith.addf %30, %29 : vector<8x128xf32>
    %32 = arith.mulf %24, %31 : vector<8x128xf32>
    %33 = arith.truncf %32 : vector<8x128xf32> to vector<8x128xbf16>
    %c0_18 = arith.constant 0 : index
    %c0_19 = arith.constant 0 : index
    %34 = vector.load %arg6[%c0_18, %c0_19] : memref<128x128xbf16, #tpu.memory_space<vmem>>, vector<128x128xbf16>
    %cst_20 = arith.constant dense<0.000000e+00> : vector<8x128xf32>
    %35 = tpu.matmul %33, %34, %cst_20 {dimension_numbers = #tpu.dot_dimension_numbers<[1], [0], [0], [1], [0, 0, 1, 1], [], []>} : vector<8x128xbf16>, vector<128x128xbf16>, vector<8x128xf32> -> vector<8x128xf32>
    %c0_21 = arith.constant 0 : index
    %c0_22 = arith.constant 0 : index
    %36 = vector.load %arg7[%c0_21, %c0_22] : memref<1x128xf32, #tpu.memory_space<vmem>>, vector<1x128xf32>
    %37 = vector.broadcast %36 : vector<1x128xf32> to vector<8x128xf32>
    %38 = arith.addf %35, %37 : vector<8x128xf32>
    %c0_23 = arith.constant 0 : index
    %c0_24 = arith.constant 0 : index
    %39 = vector.load %arg8[%c0_23, %c0_24] : memref<8x128xf32, #tpu.memory_space<vmem>>, vector<8x128xf32>
    tpu.vector_store %arg8[%c0_23, %c0_24], %38 {strides = array<i32>} : memref<8x128xf32, #tpu.memory_space<vmem>>, vector<8x128xf32>,
    return
  }
  func.func @transform_0(%arg0: i32) -> (i32, i32) {
    %c0_i32 = arith.constant 0 : i32
    %c0_i32_0 = arith.constant 0 : i32
    return %arg0, %c0_i32 : i32, i32
  }
  func.func @transform_1(%arg0: i32) -> (i32, i32) {
    %c0_i32 = arith.constant 0 : i32
    %c0_i32_0 = arith.constant 0 : i32
    %c0_i32_1 = arith.constant 0 : i32
    return %c0_i32, %c0_i32_0 : i32, i32
  }
  func.func @transform_2(%arg0: i32) -> (i32, i32) {
    %c0_i32 = arith.constant 0 : i32
    %c0_i32_0 = arith.constant 0 : i32
    %c0_i32_1 = arith.constant 0 : i32
    return %c0_i32, %c0_i32_0 : i32, i32
  }
  func.func @transform_3(%arg0: i32) -> (i32, i32) {
    %c0_i32 = arith.constant 0 : i32
    %c0_i32_0 = arith.constant 0 : i32
    %c0_i32_1 = arith.constant 0 : i32
    return %c0_i32, %c0_i32_0 : i32, i32
  }
  func.func @transform_4(%arg0: i32) -> (i32, i32) {
    %c0_i32 = arith.constant 0 : i32
    %c0_i32_0 = arith.constant 0 : i32
    %c0_i32_1 = arith.constant 0 : i32
    return %c0_i32, %c0_i32_0 : i32, i32
  }
  func.func @transform_5(%arg0: i32) -> (i32, i32) {
    %c0_i32 = arith.constant 0 : i32
    %c0_i32_0 = arith.constant 0 : i32
    %c0_i32_1 = arith.constant 0 : i32
    return %c0_i32, %c0_i32_0 : i32, i32
  }
  func.func @transform_6(%arg0: i32) -> (i32, i32) {
    %c0_i32 = arith.constant 0 : i32
    %c0_i32_0 = arith.constant 0 : i32
    %c0_i32_1 = arith.constant 0 : i32
    return %c0_i32, %c0_i32_0 : i32, i32
  }
  func.func @transform_7(%arg0: i32) -> (i32, i32) {
    %c0_i32 = arith.constant 0 : i32
    %c0_i32_0 = arith.constant 0 : i32
    return %arg0, %c0_i32 : i32, i32
  }
}

</mosaic_0001>

<llo_original>
// kernel: tpu_custom_call.1
$region0: #{tpu_custom_call.1}
  #allocation0 [shape = 'u32[]', space=smem, size = 0x4, offset = 0x4, fixed_abs, tag = 'smem constant byte address 0x4 - core index']
  #allocation1 [shape = 'u32[144,128]{1,0:T(1,128)}', space=vmem, size = 0x12000, scoped, tag = 'internal scratch']
  %s0 = inlined_call_operand.hbm [shape: f32[8,128], index: 0, kind: input, shape index: {}]
  %s1 = inlined_call_operand.hbm [shape: bf16[128,1024], index: 1, kind: input, shape index: {}]
  %s2 = inlined_call_operand.hbm [shape: f32[1,1024], index: 2, kind: input, shape index: {}]
  %s3 = inlined_call_operand.hbm [shape: bf16[1024,128], index: 3, kind: input, shape index: {}]
  %s4 = inlined_call_operand.vmem [shape: f32[1,128], index: 4, kind: input, shape index: {}]
  %s5 = inlined_call_operand.hbm [shape: bf16[128,128], index: 5, kind: input, shape index: {}]
  %s6 = inlined_call_operand.vmem [shape: f32[1,128], index: 6, kind: input, shape index: {}]
  %s7 = inlined_call_operand.hbm [shape: f32[8,128], index: 7, kind: output, shape index: {}]
  %s8 = sld [smem:[#allocation0]]
  $region58: #{tpu_custom_call.1} parent=0
    _
  %s10 = ssub.s32 1, %s8
  %s11 = scalar_select 0, %s10, %s8
  $region1: #{tpu_custom_call.1} parent=0
    #allocation2 [shape = 'u8[4096]{0}', space=vmem, size = 0x1000, scoped, tag = 'input window, operand 0, single buffered']
    #allocation3 [shape = 's32[1]{0}', space=sflag, size = 0x4, scoped, tag = 'scoped memory for tpu_custom_call.1']
    #allocation4 [shape = 's32[1]{0}', space=sflag, size = 0x4, scoped, tag = 'scoped memory for tpu_custom_call.1']
    #allocation5 [shape = 'u8[262144]{0}', space=vmem, size = 0x40000, scoped, tag = 'input window, operand 1, single buffered']
    #allocation6 [shape = 's32[1]{0}', space=sflag, size = 0x4, scoped, tag = 'scoped memory for tpu_custom_call.1']
    #allocation7 [shape = 'u8[4096]{0}', space=vmem, size = 0x1000, scoped, tag = 'input window, operand 2, single buffered']
    #allocation8 [shape = 'u8[262144]{0}', space=vmem, size = 0x40000, scoped, tag = 'input window, operand 3, single buffered']
    #allocation9 [shape = 's32[1]{0}', space=sflag, size = 0x4, scoped, tag = 'scoped memory for tpu_custom_call.1']
    #allocation10 [shape = 'u8[32768]{0}', space=vmem, size = 0x8000, scoped, tag = 'input window, operand 5, single buffered']
    #allocation11 [shape = 'u8[4096]{0}', space=vmem, size = 0x1000, scoped, tag = 'output window, operand 0, single buffered']
    %12 = vsyncpa [#allocation3], 0
    %13 = vsyncpa [#allocation6], 0
    %14 = vsyncpa [#allocation9], 0
    %15 = vsyncpa [#allocation4], 0
    // Predicated region
    $region2: #{tpu_custom_call.1} parent=1 // pred_check
      _
    $region3: #{tpu_custom_call.1} parent=1 // pred_check_branch
      %17 = sbr.rel (0) target = $region5
    $region4: #{tpu_custom_call.1} parent=1 // pred_region
      %s19 = ssub.s32 128, 128
      %20 = vsyncadd [#allocation3], %s19
      %s22 = sshll.u32 [#allocation2], 4
      %s23 = int_to_ptr.vmem [resolvable:$true] %s22
      %25 = dma.hbm_to_vmem [thread:$0]  %s0, 128, %s23, [#allocation3]
    $region5: #{tpu_custom_call.1} parent=1 // pred_fallthru
      _
    // Predicated region
    $region6: #{tpu_custom_call.1} parent=1 // pred_check
      _
    $region7: #{tpu_custom_call.1} parent=1 // pred_check_branch
      %27 = sbr.rel (0) target = $region9
    $region8: #{tpu_custom_call.1} parent=1 // pred_region
      %s29 = ssub.s32 8192, 8192
      %30 = vsyncadd [#allocation6], %s29
      %s31 = sshll.u32 [#allocation5], 4
      %s32 = int_to_ptr.vmem [resolvable:$true] %s31
      %37 = dma.hbm_to_vmem [thread:$0]  %s1, 8192, %s32, [#allocation6], 512, 512, 32
    $region9: #{tpu_custom_call.1} parent=1 // pred_fallthru
      _
    // Predicated region
    $region10: #{tpu_custom_call.1} parent=1 // pred_check
      _
    $region11: #{tpu_custom_call.1} parent=1 // pred_check_branch
      %39 = sbr.rel (0) target = $region13
    $region12: #{tpu_custom_call.1} parent=1 // pred_region
      %s41 = ssub.s32 128, 128
      %42 = vsyncadd [#allocation6], %s41
      %s44 = sshll.u32 [#allocation7], 4
      %s45 = int_to_ptr.vmem [resolvable:$true] %s44
      %47 = dma.hbm_to_vmem [thread:$0]  %s2, 128, %s45, [#allocation6]
    $region13: #{tpu_custom_call.1} parent=1 // pred_fallthru
      _
    // Predicated region
    $region14: #{tpu_custom_call.1} parent=1 // pred_check
      _
    $region15: #{tpu_custom_call.1} parent=1 // pred_check_branch
      %49 = sbr.rel (0) target = $region17
    $region16: #{tpu_custom_call.1} parent=1 // pred_region
      %s51 = ssub.s32 8192, 8192
      %52 = vsyncadd [#allocation9], %s51
      %s53 = sshll.u32 [#allocation8], 4
      %s54 = int_to_ptr.vmem [resolvable:$true] %s53
      %59 = dma.hbm_to_vmem [thread:$0]  %s3, 8192, %s54, [#allocation9], 64, 64, 4
    $region17: #{tpu_custom_call.1} parent=1 // pred_fallthru
      _
    // Predicated region
    $region18: #{tpu_custom_call.1} parent=1 // pred_check
      _
    $region19: #{tpu_custom_call.1} parent=1 // pred_check_branch
      %61 = sbr.rel (0) target = $region21
    $region20: #{tpu_custom_call.1} parent=1 // pred_region
      _
    $region21: #{tpu_custom_call.1} parent=1 // pred_fallthru
      _
    // Predicated region
    $region22: #{tpu_custom_call.1} parent=1 // pred_check
      _
    $region23: #{tpu_custom_call.1} parent=1 // pred_check_branch
      %63 = sbr.rel (0) target = $region25
    $region24: #{tpu_custom_call.1} parent=1 // pred_region
      %s65 = ssub.s32 1024, 1024
      %66 = vsyncadd [#allocation9], %s65
      %s67 = sshll.u32 [#allocation10], 4
      %s68 = int_to_ptr.vmem [resolvable:$true] %s67
      %73 = dma.hbm_to_vmem [thread:$0]  %s5, 1024, %s68, [#allocation9], 64, 64, 4
    $region25: #{tpu_custom_call.1} parent=1 // pred_fallthru
      _
    // Predicated region
    $region26: #{tpu_custom_call.1} parent=1 // pred_check
      _
    $region27: #{tpu_custom_call.1} parent=1 // pred_check_branch
      %75 = sbr.rel (0) target = $region29
    $region28: #{tpu_custom_call.1} parent=1 // pred_region
      _
    $region29: #{tpu_custom_call.1} parent=1 // pred_fallthru
      _
    // Predicated region
    $region30: #{tpu_custom_call.1} parent=1 // pred_check
      _
    $region31: #{tpu_custom_call.1} parent=1 // pred_check_branch
      %77 = sbr.rel (0) target = $region33
    $region32: #{tpu_custom_call.1} parent=1 // pred_region
      %78 = dma.done [#allocation3], 128
    $region33: #{tpu_custom_call.1} parent=1 // pred_fallthru
      _
    // Predicated region
    $region34: #{tpu_custom_call.1} parent=1 // pred_check
      _
    $region35: #{tpu_custom_call.1} parent=1 // pred_check_branch
      %80 = sbr.rel (0) target = $region37
    $region36: #{tpu_custom_call.1} parent=1 // pred_region
      %81 = dma.done [#allocation6], 8192
    $region37: #{tpu_custom_call.1} parent=1 // pred_fallthru
      _
    // Predicated region
    $region38: #{tpu_custom_call.1} parent=1 // pred_check
      _
    $region39: #{tpu_custom_call.1} parent=1 // pred_check_branch
      %83 = sbr.rel (0) target = $region41
    $region40: #{tpu_custom_call.1} parent=1 // pred_region
      %84 = dma.done [#allocation6], 128
    $region41: #{tpu_custom_call.1} parent=1 // pred_fallthru
      _
    // Predicated region
    $region42: #{tpu_custom_call.1} parent=1 // pred_check
      _
    $region43: #{tpu_custom_call.1} parent=1 // pred_check_branch
      %86 = sbr.rel (0) target = $region45
    $region44: #{tpu_custom_call.1} parent=1 // pred_region
      %87 = dma.done [#allocation9], 8192
    $region45: #{tpu_custom_call.1} parent=1 // pred_fallthru
      _
    // Predicated region
    $region46: #{tpu_custom_call.1} parent=1 // pred_check
      _
    $region47: #{tpu_custom_call.1} parent=1 // pred_check_branch
      %89 = sbr.rel (0) target = $region49
    $region48: #{tpu_custom_call.1} parent=1 // pred_region
      %90 = dma.done [#allocation9], 1024
    $region49: #{tpu_custom_call.1} parent=1 // pred_fallthru
      _
    %v92 = vld [vmem:[#allocation2] sm:$0xff]
    %v93 = vpack.c.bf16 %v92, %v92
    %v94 = vld [vmem:[#allocation5] sm:$0xff]
    %v95 = vld [vmem:[#allocation5 + $0x8] sm:$0xff]
    %v96 = vld [vmem:[#allocation5 + $0x10] sm:$0xff]
    %v97 = vld [vmem:[#allocation5 + $0x18] sm:$0xff]
    %v98 = vld [vmem:[#allocation5 + $0x20] sm:$0xff]
    %v99 = vld [vmem:[#allocation5 + $0x28] sm:$0xff]
    %v100 = vld [vmem:[#allocation5 + $0x30] sm:$0xff]
    %v101 = vld [vmem:[#allocation5 + $0x38] sm:$0xff]
    %v102 = vld [vmem:[#allocation5 + $0x40] sm:$0xff]
    %v103 = vld [vmem:[#allocation5 + $0x48] sm:$0xff]
    %v104 = vld [vmem:[#allocation5 + $0x50] sm:$0xff]
    %v105 = vld [vmem:[#allocation5 + $0x58] sm:$0xff]
    %v106 = vld [vmem:[#allocation5 + $0x60] sm:$0xff]
    %v107 = vld [vmem:[#allocation5 + $0x68] sm:$0xff]
    %v108 = vld [vmem:[#allocation5 + $0x70] sm:$0xff]
    %v109 = vld [vmem:[#allocation5 + $0x78] sm:$0xff]
    %v110 = vld [vmem:[#allocation5 + $0x80] sm:$0xff]
    %v111 = vld [vmem:[#allocation5 + $0x88] sm:$0xff]
    %v112 = vld [vmem:[#allocation5 + $0x90] sm:$0xff]
    %v113 = vld [vmem:[#allocation5 + $0x98] sm:$0xff]
    %v114 = vld [vmem:[#allocation5 + $0xa0] sm:$0xff]
    %v115 = vld [vmem:[#allocation5 + $0xa8] sm:$0xff]
    %v116 = vld [vmem:[#allocation5 + $0xb0] sm:$0xff]
    %v117 = vld [vmem:[#allocation5 + $0xb8] sm:$0xff]
    %v118 = vld [vmem:[#allocation5 + $0xc0] sm:$0xff]
    %v119 = vld [vmem:[#allocation5 + $0xc8] sm:$0xff]
    %v120 = vld [vmem:[#allocation5 + $0xd0] sm:$0xff]
    %v121 = vld [vmem:[#allocation5 + $0xd8] sm:$0xff]
    %v122 = vld [vmem:[#allocation5 + $0xe0] sm:$0xff]
    %v123 = vld [vmem:[#allocation5 + $0xe8] sm:$0xff]
    %v124 = vld [vmem:[#allocation5 + $0xf0] sm:$0xff]
    %v125 = vld [vmem:[#allocation5 + $0xf8] sm:$0xff]
    %v126 = vld [vmem:[#allocation5 + $0x100] sm:$0xff]
    %v127 = vld [vmem:[#allocation5 + $0x108] sm:$0xff]
    %v128 = vld [vmem:[#allocation5 + $0x110] sm:$0xff]
    %v129 = vld [vmem:[#allocation5 + $0x118] sm:$0xff]
    %v130 = vld [vmem:[#allocation5 + $0x120] sm:$0xff]
    %v131 = vld [vmem:[#allocation5 + $0x128] sm:$0xff]
    %v132 = vld [vmem:[#allocation5 + $0x130] sm:$0xff]
    %v133 = vld [vmem:[#allocation5 + $0x138] sm:$0xff]
    %v134 = vld [vmem:[#allocation5 + $0x140] sm:$0xff]
    %v135 = vld [vmem:[#allocation5 + $0x148] sm:$0xff]
    %v136 = vld [vmem:[#allocation5 + $0x150] sm:$0xff]
    %v137 = vld [vmem:[#allocation5 + $0x158] sm:$0xff]
    %v138 = vld [vmem:[#allocation5 + $0x160] sm:$0xff]
    %v139 = vld [vmem:[#allocation5 + $0x168] sm:$0xff]
    %v140 = vld [vmem:[#allocation5 + $0x170] sm:$0xff]
    %v141 = vld [vmem:[#allocation5 + $0x178] sm:$0xff]
    %v142 = vld [vmem:[#allocation5 + $0x180] sm:$0xff]
    %v143 = vld [vmem:[#allocation5 + $0x188] sm:$0xff]
    %v144 = vld [vmem:[#allocation5 + $0x190] sm:$0xff]
    %v145 = vld [vmem:[#allocation5 + $0x198] sm:$0xff]
    %v146 = vld [vmem:[#allocation5 + $0x1a0] sm:$0xff]
    %v147 = vld [vmem:[#allocation5 + $0x1a8] sm:$0xff]
    %v148 = vld [vmem:[#allocation5 + $0x1b0] sm:$0xff]
    %v149 = vld [vmem:[#allocation5 + $0x1b8] sm:$0xff]
    %v150 = vld [vmem:[#allocation5 + $0x1c0] sm:$0xff]
    %v151 = vld [vmem:[#allocation5 + $0x1c8] sm:$0xff]
    %v152 = vld [vmem:[#allocation5 + $0x1d0] sm:$0xff]
    %v153 = vld [vmem:[#allocation5 + $0x1d8] sm:$0xff]
    %v154 = vld [vmem:[#allocation5 + $0x1e0] sm:$0xff]
    %v155 = vld [vmem:[#allocation5 + $0x1e8] sm:$0xff]
    %v156 = vld [vmem:[#allocation5 + $0x1f0] sm:$0xff]
    %v157 = vld [vmem:[#allocation5 + $0x1f8] sm:$0xff]
    %v158 = vld [vmem:[#allocation7] sm:$0xff]
    %v160 = vlaneseq
    %v161 = vshrl.u32 %v160, 7
    %v162 = vsub.s32 0, %v161
    %v163 = vrot.slane %v158, %v162
    %v164 = vlaneseq
    %v165 = vshrl.u32 %v164, 7
    %v166 = vsub.s32 1, %v165
    %v167 = vrot.slane %v158, %v166
    %v168 = vlaneseq
    %v169 = vshrl.u32 %v168, 7
    %v170 = vsub.s32 2, %v169
    %v171 = vrot.slane %v158, %v170
    %v172 = vlaneseq
    %v173 = vshrl.u32 %v172, 7
    %v174 = vsub.s32 3, %v173
    %v175 = vrot.slane %v158, %v174
    %v176 = vlaneseq
    %v177 = vshrl.u32 %v176, 7
    %v178 = vsub.s32 4, %v177
    %v179 = vrot.slane %v158, %v178
    %v180 = vlaneseq
    %v181 = vshrl.u32 %v180, 7
    %v182 = vsub.s32 5, %v181
    %v183 = vrot.slane %v158, %v182
    %v184 = vlaneseq
    %v185 = vshrl.u32 %v184, 7
    %v186 = vsub.s32 6, %v185
    %v187 = vrot.slane %v158, %v186
    %v188 = vlaneseq
    %v189 = vshrl.u32 %v188, 7
    %v190 = vsub.s32 7, %v189
    %v191 = vrot.slane %v158, %v190
    %v264 = vunpack.c.l.b16 %v94
    %v265 = vunpack.c.h.b16 %v94
    %v266 = vunpack.c.l.b16 %v95
    %v267 = vunpack.c.h.b16 %v95
    %v268 = vunpack.c.l.b16 %v96
    %v269 = vunpack.c.h.b16 %v96
    %v270 = vunpack.c.l.b16 %v97
    %v271 = vunpack.c.h.b16 %v97
    %v272 = vunpack.c.l.b16 %v98
    %v273 = vunpack.c.h.b16 %v98
    %v274 = vunpack.c.l.b16 %v99
    %v275 = vunpack.c.h.b16 %v99
    %v276 = vunpack.c.l.b16 %v100
    %v277 = vunpack.c.h.b16 %v100
    %v278 = vunpack.c.l.b16 %v101
    %v279 = vunpack.c.h.b16 %v101
    %v280 = vunpack.c.l.b16 %v102
    %v281 = vunpack.c.h.b16 %v102
    %v282 = vunpack.c.l.b16 %v103
    %v283 = vunpack.c.h.b16 %v103
    %v284 = vunpack.c.l.b16 %v104
    %v285 = vunpack.c.h.b16 %v104
    %v286 = vunpack.c.l.b16 %v105
    %v287 = vunpack.c.h.b16 %v105
    %v288 = vunpack.c.l.b16 %v106
    %v289 = vunpack.c.h.b16 %v106
    %v290 = vunpack.c.l.b16 %v107
    %v291 = vunpack.c.h.b16 %v107
    %v292 = vunpack.c.l.b16 %v108
    %v293 = vunpack.c.h.b16 %v108
    %v294 = vunpack.c.l.b16 %v109
    %v295 = vunpack.c.h.b16 %v109
    %v296 = vunpack.c.l.b16 %v110
    %v297 = vunpack.c.h.b16 %v110
    %v298 = vunpack.c.l.b16 %v111
    %v299 = vunpack.c.h.b16 %v111
    %v300 = vunpack.c.l.b16 %v112
    %v301 = vunpack.c.h.b16 %v112
    %v302 = vunpack.c.l.b16 %v113
    %v303 = vunpack.c.h.b16 %v113
    %v304 = vunpack.c.l.b16 %v114
    %v305 = vunpack.c.h.b16 %v114
    %v306 = vunpack.c.l.b16 %v115
    %v307 = vunpack.c.h.b16 %v115
    %v308 = vunpack.c.l.b16 %v116
    %v309 = vunpack.c.h.b16 %v116
    %v310 = vunpack.c.l.b16 %v117
    %v311 = vunpack.c.h.b16 %v117
    %v312 = vunpack.c.l.b16 %v118
    %v313 = vunpack.c.h.b16 %v118
    %v314 = vunpack.c.l.b16 %v119
    %v315 = vunpack.c.h.b16 %v119
    %v316 = vunpack.c.l.b16 %v120
    %v317 = vunpack.c.h.b16 %v120
    %v318 = vunpack.c.l.b16 %v121
    %v319 = vunpack.c.h.b16 %v121
    %v320 = vunpack.c.l.b16 %v122
    %v321 = vunpack.c.h.b16 %v122
    %v322 = vunpack.c.l.b16 %v123
    %v323 = vunpack.c.h.b16 %v123
    %v324 = vunpack.c.l.b16 %v124
    %v325 = vunpack.c.h.b16 %v124
    %v326 = vunpack.c.l.b16 %v125
    %v327 = vunpack.c.h.b16 %v125
    %v328 = vunpack.c.l.b16 %v126
    %v329 = vunpack.c.h.b16 %v126
    %v330 = vunpack.c.l.b16 %v127
    %v331 = vunpack.c.h.b16 %v127
    %v332 = vunpack.c.l.b16 %v128
    %v333 = vunpack.c.h.b16 %v128
    %v334 = vunpack.c.l.b16 %v129
    %v335 = vunpack.c.h.b16 %v129
    %v336 = vunpack.c.l.b16 %v130
    %v337 = vunpack.c.h.b16 %v130
    %v338 = vunpack.c.l.b16 %v131
    %v339 = vunpack.c.h.b16 %v131
    %v340 = vunpack.c.l.b16 %v132
    %v341 = vunpack.c.h.b16 %v132
    %v342 = vunpack.c.l.b16 %v133
    %v343 = vunpack.c.h.b16 %v133
    %v344 = vunpack.c.l.b16 %v134
    %v345 = vunpack.c.h.b16 %v134
    %v346 = vunpack.c.l.b16 %v135
    %v347 = vunpack.c.h.b16 %v135
    %v348 = vunpack.c.l.b16 %v136
    %v349 = vunpack.c.h.b16 %v136
    %v350 = vunpack.c.l.b16 %v137
    %v351 = vunpack.c.h.b16 %v137
    %v352 = vunpack.c.l.b16 %v138
    %v353 = vunpack.c.h.b16 %v138
    %v354 = vunpack.c.l.b16 %v139
    %v355 = vunpack.c.h.b16 %v139
    %v356 = vunpack.c.l.b16 %v140
    %v357 = vunpack.c.h.b16 %v140
    %v358 = vunpack.c.l.b16 %v141
    %v359 = vunpack.c.h.b16 %v141
    %v360 = vunpack.c.l.b16 %v142
    %v361 = vunpack.c.h.b16 %v142
    %v362 = vunpack.c.l.b16 %v143
    %v363 = vunpack.c.h.b16 %v143
    %v364 = vunpack.c.l.b16 %v144
    %v365 = vunpack.c.h.b16 %v144
    %v366 = vunpack.c.l.b16 %v145
    %v367 = vunpack.c.h.b16 %v145
    %v368 = vunpack.c.l.b16 %v146
    %v369 = vunpack.c.h.b16 %v146
    %v370 = vunpack.c.l.b16 %v147
    %v371 = vunpack.c.h.b16 %v147
    %v372 = vunpack.c.l.b16 %v148
    %v373 = vunpack.c.h.b16 %v148
    %v374 = vunpack.c.l.b16 %v149
    %v375 = vunpack.c.h.b16 %v149
    %v376 = vunpack.c.l.b16 %v150
    %v377 = vunpack.c.h.b16 %v150
    %v378 = vunpack.c.l.b16 %v151
    %v379 = vunpack.c.h.b16 %v151
    %v380 = vunpack.c.l.b16 %v152
    %v381 = vunpack.c.h.b16 %v152
    %v382 = vunpack.c.l.b16 %v153
    %v383 = vunpack.c.h.b16 %v153
    %v384 = vunpack.c.l.b16 %v154
    %v385 = vunpack.c.h.b16 %v154
    %v386 = vunpack.c.l.b16 %v155
    %v387 = vunpack.c.h.b16 %v155
    %v388 = vunpack.c.l.b16 %v156
    %v389 = vunpack.c.h.b16 %v156
    %v390 = vunpack.c.l.b16 %v157
    %v391 = vunpack.c.h.b16 %v157
    %v392 = vpack.c.b16 %v272, %v264
    %v393 = vpack.c.b16 %v273, %v265
    %v394 = vpack.c.b16 %v274, %v266
    %v395 = vpack.c.b16 %v275, %v267
    %v396 = vpack.c.b16 %v276, %v268
    %v397 = vpack.c.b16 %v277, %v269
    %v398 = vpack.c.b16 %v278, %v270
    %v399 = vpack.c.b16 %v279, %v271
    %v400 = vpack.c.b16 %v288, %v280
    %v401 = vpack.c.b16 %v289, %v281
    %v402 = vpack.c.b16 %v290, %v282
    %v403 = vpack.c.b16 %v291, %v283
    %v404 = vpack.c.b16 %v292, %v284
    %v405 = vpack.c.b16 %v293, %v285
    %v406 = vpack.c.b16 %v294, %v286
    %v407 = vpack.c.b16 %v295, %v287
    %v408 = vpack.c.b16 %v304, %v296
    %v409 = vpack.c.b16 %v305, %v297
    %v410 = vpack.c.b16 %v306, %v298
    %v411 = vpack.c.b16 %v307, %v299
    %v412 = vpack.c.b16 %v308, %v300
    %v413 = vpack.c.b16 %v309, %v301
    %v414 = vpack.c.b16 %v310, %v302
    %v415 = vpack.c.b16 %v311, %v303
    %v416 = vpack.c.b16 %v320, %v312
    %v417 = vpack.c.b16 %v321, %v313
    %v418 = vpack.c.b16 %v322, %v314
    %v419 = vpack.c.b16 %v323, %v315
    %v420 = vpack.c.b16 %v324, %v316
    %v421 = vpack.c.b16 %v325, %v317
    %v422 = vpack.c.b16 %v326, %v318
    %v423 = vpack.c.b16 %v327, %v319
    %v424 = vpack.c.b16 %v336, %v328
    %v425 = vpack.c.b16 %v337, %v329
    %v426 = vpack.c.b16 %v338, %v330
    %v427 = vpack.c.b16 %v339, %v331
    %v428 = vpack.c.b16 %v340, %v332
    %v429 = vpack.c.b16 %v341, %v333
    %v430 = vpack.c.b16 %v342, %v334
    %v431 = vpack.c.b16 %v343, %v335
    %v432 = vpack.c.b16 %v352, %v344
    %v433 = vpack.c.b16 %v353, %v345
    %v434 = vpack.c.b16 %v354, %v346
    %v435 = vpack.c.b16 %v355, %v347
    %v436 = vpack.c.b16 %v356, %v348
    %v437 = vpack.c.b16 %v357, %v349
    %v438 = vpack.c.b16 %v358, %v350
    %v439 = vpack.c.b16 %v359, %v351
    %v440 = vpack.c.b16 %v368, %v360
    %v441 = vpack.c.b16 %v369, %v361
    %v442 = vpack.c.b16 %v370, %v362
    %v443 = vpack.c.b16 %v371, %v363
    %v444 = vpack.c.b16 %v372, %v364
    %v445 = vpack.c.b16 %v373, %v365
    %v446 = vpack.c.b16 %v374, %v366
    %v447 = vpack.c.b16 %v375, %v367
    %v448 = vpack.c.b16 %v384, %v376
    %v449 = vpack.c.b16 %v385, %v377
    %v450 = vpack.c.b16 %v386, %v378
    %v451 = vpack.c.b16 %v387, %v379
    %v452 = vpack.c.b16 %v388, %v380
    %v453 = vpack.c.b16 %v389, %v381
    %v454 = vpack.c.b16 %v390, %v382
    %v455 = vpack.c.b16 %v391, %v383
    %520 = vmatprep.subr.bf16.mxu0 %v393
    %521 = vmatpush1.bf16.msra.mxu0 %v392
    %522 = vmatprep.subr.bf16.mxu0 %v401
    %523 = vmatpush1.bf16.msra.mxu0 %v400
    %524 = vmatprep.subr.bf16.mxu0 %v409
    %525 = vmatpush1.bf16.msra.mxu0 %v408
    %526 = vmatprep.subr.bf16.mxu0 %v417
    %527 = vmatpush1.bf16.msra.mxu0 %v416
    %528 = vmatprep.subr.bf16.mxu0 %v425
    %529 = vmatpush1.bf16.msra.mxu0 %v424
    %530 = vmatprep.subr.bf16.mxu0 %v433
    %531 = vmatpush1.bf16.msra.mxu0 %v432
    %532 = vmatprep.subr.bf16.mxu0 %v441
    %533 = vmatpush1.bf16.msra.mxu0 %v440
    %534 = vmatprep.subr.bf16.mxu0 %v449
    %535 = vmatpush1.bf16.msra.mxu0 %v448
    %536 = vmatprep.subr.bf16.mxu0 0
    %537 = vmatpush1.bf16.msra.mxu0 0
    %538 = vmatprep.subr.bf16.mxu0 0
    %539 = vmatpush1.bf16.msra.mxu0 0
    %540 = vmatprep.subr.bf16.mxu0 0
    %541 = vmatpush1.bf16.msra.mxu0 0
    %542 = vmatprep.subr.bf16.mxu0 0
    %543 = vmatpush1.bf16.msra.mxu0 0
    %544 = vmatprep.subr.bf16.mxu0 0
    %545 = vmatpush1.bf16.msra.mxu0 0
    %546 = vmatprep.subr.bf16.mxu0 0
    %547 = vmatpush1.bf16.msra.mxu0 0
    %548 = vmatprep.subr.bf16.mxu0 0
    %549 = vmatpush1.bf16.msra.mxu0 0
    %550 = vmatprep.subr.bf16.mxu0 0
    %551 = vmatpush1.bf16.msra.mxu0 0
    %552 = vmatprep.mubr.bf16.mxu0 0
    %553 = vmatmul.mubr.bf16.gmra.mrb[0].mxu0 %v93
    %v554 = vpop.f32.mrb[0].mxu0
    %v555 = vadd.f32 %v163, %v554
    %v556 = vpop.f32.mrb[0].mxu0
    %v557 = vadd.f32 %v167, %v556
    %v558 = vpop.f32.mrb[0].mxu0
    %v559 = vpop.f32.mrb[0].mxu0
    %560 = vdwg.mxu0
    %561 = vmatprep.subr.bf16.mxu0 %v395
    %562 = vmatpush1.bf16.msra.mxu0 %v394
    %563 = vmatprep.subr.bf16.mxu0 %v403
    %564 = vmatpush1.bf16.msra.mxu0 %v402
    %565 = vmatprep.subr.bf16.mxu0 %v411
    %566 = vmatpush1.bf16.msra.mxu0 %v410
    %567 = vmatprep.subr.bf16.mxu0 %v419
    %568 = vmatpush1.bf16.msra.mxu0 %v418
    %569 = vmatprep.subr.bf16.mxu0 %v427
    %570 = vmatpush1.bf16.msra.mxu0 %v426
    %571 = vmatprep.subr.bf16.mxu0 %v435
    %572 = vmatpush1.bf16.msra.mxu0 %v434
    %573 = vmatprep.subr.bf16.mxu0 %v443
    %574 = vmatpush1.bf16.msra.mxu0 %v442
    %575 = vmatprep.subr.bf16.mxu0 %v451
    %576 = vmatpush1.bf16.msra.mxu0 %v450
    %577 = vmatprep.subr.bf16.mxu0 0
    %578 = vmatpush1.bf16.msra.mxu0 0
    %579 = vmatprep.subr.bf16.mxu0 0
    %580 = vmatpush1.bf16.msra.mxu0 0
    %581 = vmatprep.subr.bf16.mxu0 0
    %582 = vmatpush1.bf16.msra.mxu0 0
    %583 = vmatprep.subr.bf16.mxu0 0
    %584 = vmatpush1.bf16.msra.mxu0 0
    %585 = vmatprep.subr.bf16.mxu0 0
    %586 = vmatpush1.bf16.msra.mxu0 0
    %587 = vmatprep.subr.bf16.mxu0 0
    %588 = vmatpush1.bf16.msra.mxu0 0
    %589 = vmatprep.subr.bf16.mxu0 0
    %590 = vmatpush1.bf16.msra.mxu0 0
    %591 = vmatprep.subr.bf16.mxu0 0
    %592 = vmatpush1.bf16.msra.mxu0 0
    %593 = vmatprep.mubr.bf16.mxu0 0
    %594 = vmatmul.mubr.bf16.gmra.mrb[0].mxu0 %v93
    %v595 = vpop.f32.mrb[0].mxu0
    %v596 = vadd.f32 %v171, %v595
    %v597 = vpop.f32.mrb[0].mxu0
    %v598 = vadd.f32 %v175, %v597
    %v599 = vpop.f32.mrb[0].mxu0
    %v600 = vpop.f32.mrb[0].mxu0
    %601 = vdwg.mxu0
    %602 = vmatprep.subr.bf16.mxu0 %v397
    %603 = vmatpush1.bf16.msra.mxu0 %v396
    %604 = vmatprep.subr.bf16.mxu0 %v405
    %605 = vmatpush1.bf16.msra.mxu0 %v404
    %606 = vmatprep.subr.bf16.mxu0 %v413
    %607 = vmatpush1.bf16.msra.mxu0 %v412
    %608 = vmatprep.subr.bf16.mxu0 %v421
    %609 = vmatpush1.bf16.msra.mxu0 %v420
    %610 = vmatprep.subr.bf16.mxu0 %v429
    %611 = vmatpush1.bf16.msra.mxu0 %v428
    %612 = vmatprep.subr.bf16.mxu0 %v437
    %613 = vmatpush1.bf16.msra.mxu0 %v436
    %614 = vmatprep.subr.bf16.mxu0 %v445
    %615 = vmatpush1.bf16.msra.mxu0 %v444
    %616 = vmatprep.subr.bf16.mxu0 %v453
    %617 = vmatpush1.bf16.msra.mxu0 %v452
    %618 = vmatprep.subr.bf16.mxu0 0
    %619 = vmatpush1.bf16.msra.mxu0 0
    %620 = vmatprep.subr.bf16.mxu0 0
    %621 = vmatpush1.bf16.msra.mxu0 0
    %622 = vmatprep.subr.bf16.mxu0 0
    %623 = vmatpush1.bf16.msra.mxu0 0
    %624 = vmatprep.subr.bf16.mxu0 0
    %625 = vmatpush1.bf16.msra.mxu0 0
    %626 = vmatprep.subr.bf16.mxu0 0
    %627 = vmatpush1.bf16.msra.mxu0 0
    %628 = vmatprep.subr.bf16.mxu0 0
    %629 = vmatpush1.bf16.msra.mxu0 0
    %630 = vmatprep.subr.bf16.mxu0 0
    %631 = vmatpush1.bf16.msra.mxu0 0
    %632 = vmatprep.subr.bf16.mxu0 0
    %633 = vmatpush1.bf16.msra.mxu0 0
    %634 = vmatprep.mubr.bf16.mxu0 0
    %635 = vmatmul.mubr.bf16.gmra.mrb[0].mxu0 %v93
    %v636 = vpop.f32.mrb[0].mxu0
    %v637 = vadd.f32 %v179, %v636
    %v638 = vpop.f32.mrb[0].mxu0
    %v639 = vadd.f32 %v183, %v638
    %v640 = vpop.f32.mrb[0].mxu0
    %v641 = vpop.f32.mrb[0].mxu0
    %642 = vdwg.mxu0
    %643 = vmatprep.subr.bf16.mxu0 %v399
    %644 = vmatpush1.bf16.msra.mxu0 %v398
    %645 = vmatprep.subr.bf16.mxu0 %v407
    %646 = vmatpush1.bf16.msra.mxu0 %v406
    %647 = vmatprep.subr.bf16.mxu0 %v415
    %648 = vmatpush1.bf16.msra.mxu0 %v414
    %649 = vmatprep.subr.bf16.mxu0 %v423
    %650 = vmatpush1.bf16.msra.mxu0 %v422
    %651 = vmatprep.subr.bf16.mxu0 %v431
    %652 = vmatpush1.bf16.msra.mxu0 %v430
    %653 = vmatprep.subr.bf16.mxu0 %v439
    %654 = vmatpush1.bf16.msra.mxu0 %v438
    %655 = vmatprep.subr.bf16.mxu0 %v447
    %656 = vmatpush1.bf16.msra.mxu0 %v446
    %657 = vmatprep.subr.bf16.mxu0 %v455
    %658 = vmatpush1.bf16.msra.mxu0 %v454
    %659 = vmatprep.subr.bf16.mxu0 0
    %660 = vmatpush1.bf16.msra.mxu0 0
    %661 = vmatprep.subr.bf16.mxu0 0
    %662 = vmatpush1.bf16.msra.mxu0 0
    %663 = vmatprep.subr.bf16.mxu0 0
    %664 = vmatpush1.bf16.msra.mxu0 0
    %665 = vmatprep.subr.bf16.mxu0 0
    %666 = vmatpush1.bf16.msra.mxu0 0
    %667 = vmatprep.subr.bf16.mxu0 0
    %668 = vmatpush1.bf16.msra.mxu0 0
    %669 = vmatprep.subr.bf16.mxu0 0
    %670 = vmatpush1.bf16.msra.mxu0 0
    %671 = vmatprep.subr.bf16.mxu0 0
    %672 = vmatpush1.bf16.msra.mxu0 0
    %673 = vmatprep.subr.bf16.mxu0 0
    %674 = vmatpush1.bf16.msra.mxu0 0
    %675 = vmatprep.mubr.bf16.mxu0 0
    %676 = vmatmul.mubr.bf16.gmra.mrb[0].mxu0 %v93
    %v677 = vpop.f32.mrb[0].mxu0
    %v678 = vadd.f32 %v187, %v677
    %v679 = vpop.f32.mrb[0].mxu0
    %v680 = vadd.f32 %v191, %v679
    %v681 = vpop.f32.mrb[0].mxu0
    %v682 = vpop.f32.mrb[0].mxu0
    %683 = vdwg.mxu0
    %v684 = vmul.f32 %v555, 0.5
    %v685 = vmul.f32 %v557, 0.5
    %v686 = vmul.f32 %v596, 0.5
    %v687 = vmul.f32 %v598, 0.5
    %v688 = vmul.f32 %v637, 0.5
    %v689 = vmul.f32 %v639, 0.5
    %v690 = vmul.f32 %v678, 0.5
    %v691 = vmul.f32 %v680, 0.5
    %v692 = vmul.f32 %v555, 0.70710677
    %v693 = vmul.f32 %v557, 0.70710677
    %v694 = vmul.f32 %v596, 0.70710677
    %v695 = vmul.f32 %v598, 0.70710677
    %v696 = vmul.f32 %v637, 0.70710677
    %v697 = vmul.f32 %v639, 0.70710677
    %v698 = vmul.f32 %v678, 0.70710677
    %v699 = vmul.f32 %v680, 0.70710677
    %v700 = verf.f32.pop %v692
    %v701 = verf.f32.pop %v693
    %v702 = verf.f32.pop %v694
    %v703 = verf.f32.pop %v695
    %v704 = verf.f32.pop %v696
    %v705 = verf.f32.pop %v697
    %v706 = verf.f32.pop %v698
    %v707 = verf.f32.pop %v699
    %v708 = vadd.f32 %v700, 1.0
    %v709 = vadd.f32 %v701, 1.0
    %v710 = vadd.f32 %v702, 1.0
    %v711 = vadd.f32 %v703, 1.0
    %v712 = vadd.f32 %v704, 1.0
    %v713 = vadd.f32 %v705, 1.0
    %v714 = vadd.f32 %v706, 1.0
    %v715 = vadd.f32 %v707, 1.0
    %v716 = vmul.f32 %v684, %v708
    %v717 = vmul.f32 %v685, %v709
    %v718 = vmul.f32 %v686, %v710
    %v719 = vmul.f32 %v687, %v711
    %v720 = vmul.f32 %v688, %v712
    %v721 = vmul.f32 %v689, %v713
    %v722 = vmul.f32 %v690, %v714
    %v723 = vmul.f32 %v691, %v715
    %v724 = vpack.c.bf16 %v716, %v716
    %v725 = vpack.c.bf16 %v717, %v717
    %v726 = vpack.c.bf16 %v718, %v718
    %v727 = vpack.c.bf16 %v719, %v719
    %v728 = vpack.c.bf16 %v720, %v720
    %v729 = vpack.c.bf16 %v721, %v721
    %v730 = vpack.c.bf16 %v722, %v722
    %v731 = vpack.c.bf16 %v723, %v723
    %v732 = vld [vmem:[#allocation8] sm:$0xf]
    %v733 = vld [vmem:[#allocation8 + $0x4] sm:$0xf]
    %v734 = vld [vmem:[#allocation8 + $0x8] sm:$0xf]
    %v735 = vld [vmem:[#allocation8 + $0xc] sm:$0xf]
    %v736 = vld [vmem:[#allocation8 + $0x10] sm:$0xf]
    %v737 = vld [vmem:[#allocation8 + $0x14] sm:$0xf]
    %v738 = vld [vmem:[#allocation8 + $0x18] sm:$0xf]
    %v739 = vld [vmem:[#allocation8 + $0x1c] sm:$0xf]
    %v740 = vld [vmem:[#allocation8 + $0x20] sm:$0xf]
    %v741 = vld [vmem:[#allocation8 + $0x24] sm:$0xf]
    %v742 = vld [vmem:[#allocation8 + $0x28] sm:$0xf]
    %v743 = vld [vmem:[#allocation8 + $0x2c] sm:$0xf]
    %v744 = vld [vmem:[#allocation8 + $0x30] sm:$0xf]
    %v745 = vld [vmem:[#allocation8 + $0x34] sm:$0xf]
    %v746 = vld [vmem:[#allocation8 + $0x38] sm:$0xf]
    %v747 = vld [vmem:[#allocation8 + $0x3c] sm:$0xf]
    %v748 = vld [vmem:[#allocation8 + $0x40] sm:$0xf]
    %v749 = vld [vmem:[#allocation8 + $0x44] sm:$0xf]
    %v750 = vld [vmem:[#allocation8 + $0x48] sm:$0xf]
    %v751 = vld [vmem:[#allocation8 + $0x4c] sm:$0xf]
    %v752 = vld [vmem:[#allocation8 + $0x50] sm:$0xf]
    %v753 = vld [vmem:[#allocation8 + $0x54] sm:$0xf]
    %v754 = vld [vmem:[#allocation8 + $0x58] sm:$0xf]
    %v755 = vld [vmem:[#allocation8 + $0x5c] sm:$0xf]
    %v756 = vld [vmem:[#allocation8 + $0x60] sm:$0xf]
    %v757 = vld [vmem:[#allocation8 + $0x64] sm:$0xf]
    %v758 = vld [vmem:[#allocation8 + $0x68] sm:$0xf]
    %v759 = vld [vmem:[#allocation8 + $0x6c] sm:$0xf]
    %v760 = vld [vmem:[#allocation8 + $0x70] sm:$0xf]
    %v761 = vld [vmem:[#allocation8 + $0x74] sm:$0xf]
    %v762 = vld [vmem:[#allocation8 + $0x78] sm:$0xf]
    %v763 = vld [vmem:[#allocation8 + $0x7c] sm:$0xf]
    %v764 = vld [vmem:[#allocation8 + $0x80] sm:$0xf]
    %v765 = vld [vmem:[#allocation8 + $0x84] sm:$0xf]
    %v766 = vld [vmem:[#allocation8 + $0x88] sm:$0xf]
    %v767 = vld [vmem:[#allocation8 + $0x8c] sm:$0xf]
    %v768 = vld [vmem:[#allocation8 + $0x90] sm:$0xf]
    %v769 = vld [vmem:[#allocation8 + $0x94] sm:$0xf]
    %v770 = vld [vmem:[#allocation8 + $0x98] sm:$0xf]
    %v771 = vld [vmem:[#allocation8 + $0x9c] sm:$0xf]
    %v772 = vld [vmem:[#allocation8 + $0xa0] sm:$0xf]
    %v773 = vld [vmem:[#allocation8 + $0xa4] sm:$0xf]
    %v774 = vld [vmem:[#allocation8 + $0xa8] sm:$0xf]
    %v775 = vld [vmem:[#allocation8 + $0xac] sm:$0xf]
    %v776 = vld [vmem:[#allocation8 + $0xb0] sm:$0xf]
    %v777 = vld [vmem:[#allocation8 + $0xb4] sm:$0xf]
    %v778 = vld [vmem:[#allocation8 + $0xb8] sm:$0xf]
    %v779 = vld [vmem:[#allocation8 + $0xbc] sm:$0xf]
    %v780 = vld [vmem:[#allocation8 + $0xc0] sm:$0xf]
    %v781 = vld [vmem:[#allocation8 + $0xc4] sm:$0xf]
    %v782 = vld [vmem:[#allocation8 + $0xc8] sm:$0xf]
    %v783 = vld [vmem:[#allocation8 + $0xcc] sm:$0xf]
    %v784 = vld [vmem:[#allocation8 + $0xd0] sm:$0xf]
    %v785 = vld [vmem:[#allocation8 + $0xd4] sm:$0xf]
    %v786 = vld [vmem:[#allocation8 + $0xd8] sm:$0xf]
    %v787 = vld [vmem:[#allocation8 + $0xdc] sm:$0xf]
    %v788 = vld [vmem:[#allocation8 + $0xe0] sm:$0xf]
    %v789 = vld [vmem:[#allocation8 + $0xe4] sm:$0xf]
    %v790 = vld [vmem:[#allocation8 + $0xe8] sm:$0xf]
    %v791 = vld [vmem:[#allocation8 + $0xec] sm:$0xf]
    %v792 = vld [vmem:[#allocation8 + $0xf0] sm:$0xf]
    %v793 = vld [vmem:[#allocation8 + $0xf4] sm:$0xf]
    %v794 = vld [vmem:[#allocation8 + $0xf8] sm:$0xf]
    %v795 = vld [vmem:[#allocation8 + $0xfc] sm:$0xf]
    %v796 = vld [vmem:[#allocation8 + $0x100] sm:$0xf]
    %v797 = vld [vmem:[#allocation8 + $0x104] sm:$0xf]
    %v798 = vld [vmem:[#allocation8 + $0x108] sm:$0xf]
    %v799 = vld [vmem:[#allocation8 + $0x10c] sm:$0xf]
    %v800 = vld [vmem:[#allocation8 + $0x110] sm:$0xf]
    %v801 = vld [vmem:[#allocation8 + $0x114] sm:$0xf]
    %v802 = vld [vmem:[#allocation8 + $0x118] sm:$0xf]
    %v803 = vld [vmem:[#allocation8 + $0x11c] sm:$0xf]
    %v804 = vld [vmem:[#allocation8 + $0x120] sm:$0xf]
    %v805 = vld [vmem:[#allocation8 + $0x124] sm:$0xf]
    %v806 = vld [vmem:[#allocation8 + $0x128] sm:$0xf]
    %v807 = vld [vmem:[#allocation8 + $0x12c] sm:$0xf]
    %v808 = vld [vmem:[#allocation8 + $0x130] sm:$0xf]
    %v809 = vld [vmem:[#allocation8 + $0x134] sm:$0xf]
    %v810 = vld [vmem:[#allocation8 + $0x138] sm:$0xf]
    %v811 = vld [vmem:[#allocation8 + $0x13c] sm:$0xf]
    %v812 = vld [vmem:[#allocation8 + $0x140] sm:$0xf]
    %v813 = vld [vmem:[#allocation8 + $0x144] sm:$0xf]
    %v814 = vld [vmem:[#allocation8 + $0x148] sm:$0xf]
    %v815 = vld [vmem:[#allocation8 + $0x14c] sm:$0xf]
    %v816 = vld [vmem:[#allocation8 + $0x150] sm:$0xf]
    %v817 = vld [vmem:[#allocation8 + $0x154] sm:$0xf]
    %v818 = vld [vmem:[#allocation8 + $0x158] sm:$0xf]
    %v819 = vld [vmem:[#allocation8 + $0x15c] sm:$0xf]
    %v820 = vld [vmem:[#allocation8 + $0x160] sm:$0xf]
    %v821 = vld [vmem:[#allocation8 + $0x164] sm:$0xf]
    %v822 = vld [vmem:[#allocation8 + $0x168] sm:$0xf]
    %v823 = vld [vmem:[#allocation8 + $0x16c] sm:$0xf]
    %v824 = vld [vmem:[#allocation8 + $0x170] sm:$0xf]
    %v825 = vld [vmem:[#allocation8 + $0x174] sm:$0xf]
    %v826 = vld [vmem:[#allocation8 + $0x178] sm:$0xf]
    %v827 = vld [vmem:[#allocation8 + $0x17c] sm:$0xf]
    %v828 = vld [vmem:[#allocation8 + $0x180] sm:$0xf]
    %v829 = vld [vmem:[#allocation8 + $0x184] sm:$0xf]
    %v830 = vld [vmem:[#allocation8 + $0x188] sm:$0xf]
    %v831 = vld [vmem:[#allocation8 + $0x18c] sm:$0xf]
    %v832 = vld [vmem:[#allocation8 + $0x190] sm:$0xf]
    %v833 = vld [vmem:[#allocation8 + $0x194] sm:$0xf]
    %v834 = vld [vmem:[#allocation8 + $0x198] sm:$0xf]
    %v835 = vld [vmem:[#allocation8 + $0x19c] sm:$0xf]
    %v836 = vld [vmem:[#allocation8 + $0x1a0] sm:$0xf]
    %v837 = vld [vmem:[#allocation8 + $0x1a4] sm:$0xf]
    %v838 = vld [vmem:[#allocation8 + $0x1a8] sm:$0xf]
    %v839 = vld [vmem:[#allocation8 + $0x1ac] sm:$0xf]
    %v840 = vld [vmem:[#allocation8 + $0x1b0] sm:$0xf]
    %v841 = vld [vmem:[#allocation8 + $0x1b4] sm:$0xf]
    %v842 = vld [vmem:[#allocation8 + $0x1b8] sm:$0xf]
    %v843 = vld [vmem:[#allocation8 + $0x1bc] sm:$0xf]
    %v844 = vld [vmem:[#allocation8 + $0x1c0] sm:$0xf]
    %v845 = vld [vmem:[#allocation8 + $0x1c4] sm:$0xf]
    %v846 = vld [vmem:[#allocation8 + $0x1c8] sm:$0xf]
    %v847 = vld [vmem:[#allocation8 + $0x1cc] sm:$0xf]
    %v848 = vld [vmem:[#allocation8 + $0x1d0] sm:$0xf]
    %v849 = vld [vmem:[#allocation8 + $0x1d4] sm:$0xf]
    %v850 = vld [vmem:[#allocation8 + $0x1d8] sm:$0xf]
    %v851 = vld [vmem:[#allocation8 + $0x1dc] sm:$0xf]
    %v852 = vld [vmem:[#allocation8 + $0x1e0] sm:$0xf]
    %v853 = vld [vmem:[#allocation8 + $0x1e4] sm:$0xf]
    %v854 = vld [vmem:[#allocation8 + $0x1e8] sm:$0xf]
    %v855 = vld [vmem:[#allocation8 + $0x1ec] sm:$0xf]
    %v856 = vld [vmem:[#allocation8 + $0x1f0] sm:$0xf]
    %v857 = vld [vmem:[#allocation8 + $0x1f4] sm:$0xf]
    %v858 = vld [vmem:[#allocation8 + $0x1f8] sm:$0xf]
    %v859 = vld [vmem:[#allocation8 + $0x1fc] sm:$0xf]
    %v860 = vld [vmem:[%s4] sm:$0x1]
    %v862 = vlaneseq
    %v863 = vshrl.u32 %v862, 7
    %v864 = vsub.s32 0, %v863
    %v865 = vrot.slane %v860, %v864
    %v995 = vunpack.c.l.b16 %v732
    %v996 = vunpack.c.l.b16 %v733
    %v997 = vunpack.c.l.b16 %v734
    %v998 = vunpack.c.l.b16 %v735
    %v999 = vunpack.c.l.b16 %v736
    %v1000 = vunpack.c.l.b16 %v737
    %v1001 = vunpack.c.l.b16 %v738
    %v1002 = vunpack.c.l.b16 %v739
    %v1003 = vunpack.c.l.b16 %v740
    %v1004 = vunpack.c.l.b16 %v741
    %v1005 = vunpack.c.l.b16 %v742
    %v1006 = vunpack.c.l.b16 %v743
    %v1007 = vunpack.c.l.b16 %v744
    %v1008 = vunpack.c.l.b16 %v745
    %v1009 = vunpack.c.l.b16 %v746
    %v1010 = vunpack.c.l.b16 %v747
    %v1011 = vunpack.c.l.b16 %v748
    %v1012 = vunpack.c.l.b16 %v749
    %v1013 = vunpack.c.l.b16 %v750
    %v1014 = vunpack.c.l.b16 %v751
    %v1015 = vunpack.c.l.b16 %v752
    %v1016 = vunpack.c.l.b16 %v753
    %v1017 = vunpack.c.l.b16 %v754
    %v1018 = vunpack.c.l.b16 %v755
    %v1019 = vunpack.c.l.b16 %v756
    %v1020 = vunpack.c.l.b16 %v757
    %v1021 = vunpack.c.l.b16 %v758
    %v1022 = vunpack.c.l.b16 %v759
    %v1023 = vunpack.c.l.b16 %v760
    %v1024 = vunpack.c.l.b16 %v761
    %v1025 = vunpack.c.l.b16 %v762
    %v1026 = vunpack.c.l.b16 %v763
    %v1027 = vunpack.c.l.b16 %v764
    %v1028 = vunpack.c.l.b16 %v765
    %v1029 = vunpack.c.l.b16 %v766
    %v1030 = vunpack.c.l.b16 %v767
    %v1031 = vunpack.c.l.b16 %v768
    %v1032 = vunpack.c.l.b16 %v769
    %v1033 = vunpack.c.l.b16 %v770
    %v1034 = vunpack.c.l.b16 %v771
    %v1035 = vunpack.c.l.b16 %v772
    %v1036 = vunpack.c.l.b16 %v773
    %v1037 = vunpack.c.l.b16 %v774
    %v1038 = vunpack.c.l.b16 %v775
    %v1039 = vunpack.c.l.b16 %v776
    %v1040 = vunpack.c.l.b16 %v777
    %v1041 = vunpack.c.l.b16 %v778
    %v1042 = vunpack.c.l.b16 %v779
    %v1043 = vunpack.c.l.b16 %v780
    %v1044 = vunpack.c.l.b16 %v781
    %v1045 = vunpack.c.l.b16 %v782
    %v1046 = vunpack.c.l.b16 %v783
    %v1047 = vunpack.c.l.b16 %v784
    %v1048 = vunpack.c.l.b16 %v785
    %v1049 = vunpack.c.l.b16 %v786
    %v1050 = vunpack.c.l.b16 %v787
    %v1051 = vunpack.c.l.b16 %v788
    %v1052 = vunpack.c.l.b16 %v789
    %v1053 = vunpack.c.l.b16 %v790
    %v1054 = vunpack.c.l.b16 %v791
    %v1055 = vunpack.c.l.b16 %v792
    %v1056 = vunpack.c.l.b16 %v793
    %v1057 = vunpack.c.l.b16 %v794
    %v1058 = vunpack.c.l.b16 %v795
    %v1059 = vunpack.c.l.b16 %v796
    %v1060 = vunpack.c.l.b16 %v797
    %v1061 = vunpack.c.l.b16 %v798
    %v1062 = vunpack.c.l.b16 %v799
    %v1063 = vunpack.c.l.b16 %v800
    %v1064 = vunpack.c.l.b16 %v801
    %v1065 = vunpack.c.l.b16 %v802
    %v1066 = vunpack.c.l.b16 %v803
    %v1067 = vunpack.c.l.b16 %v804
    %v1068 = vunpack.c.l.b16 %v805
    %v1069 = vunpack.c.l.b16 %v806
    %v1070 = vunpack.c.l.b16 %v807
    %v1071 = vunpack.c.l.b16 %v808
    %v1072 = vunpack.c.l.b16 %v809
    %v1073 = vunpack.c.l.b16 %v810
    %v1074 = vunpack.c.l.b16 %v811
    %v1075 = vunpack.c.l.b16 %v812
    %v1076 = vunpack.c.l.b16 %v813
    %v1077 = vunpack.c.l.b16 %v814
    %v1078 = vunpack.c.l.b16 %v815
    %v1079 = vunpack.c.l.b16 %v816
    %v1080 = vunpack.c.l.b16 %v817
    %v1081 = vunpack.c.l.b16 %v818
    %v1082 = vunpack.c.l.b16 %v819
    %v1083 = vunpack.c.l.b16 %v820
    %v1084 = vunpack.c.l.b16 %v821
    %v1085 = vunpack.c.l.b16 %v822
    %v1086 = vunpack.c.l.b16 %v823
    %v1087 = vunpack.c.l.b16 %v824
    %v1088 = vunpack.c.l.b16 %v825
    %v1089 = vunpack.c.l.b16 %v826
    %v1090 = vunpack.c.l.b16 %v827
    %v1091 = vunpack.c.l.b16 %v828
    %v1092 = vunpack.c.l.b16 %v829
    %v1093 = vunpack.c.l.b16 %v830
    %v1094 = vunpack.c.l.b16 %v831
    %v1095 = vunpack.c.l.b16 %v832
    %v1096 = vunpack.c.l.b16 %v833
    %v1097 = vunpack.c.l.b16 %v834
    %v1098 = vunpack.c.l.b16 %v835
    %v1099 = vunpack.c.l.b16 %v836
    %v1100 = vunpack.c.l.b16 %v837
    %v1101 = vunpack.c.l.b16 %v838
    %v1102 = vunpack.c.l.b16 %v839
    %v1103 = vunpack.c.l.b16 %v840
    %v1104 = vunpack.c.l.b16 %v841
    %v1105 = vunpack.c.l.b16 %v842
    %v1106 = vunpack.c.l.b16 %v843
    %v1107 = vunpack.c.l.b16 %v844
    %v1108 = vunpack.c.l.b16 %v845
    %v1109 = vunpack.c.l.b16 %v846
    %v1110 = vunpack.c.l.b16 %v847
    %v1111 = vunpack.c.l.b16 %v848
    %v1112 = vunpack.c.l.b16 %v849
    %v1113 = vunpack.c.l.b16 %v850
    %v1114 = vunpack.c.l.b16 %v851
    %v1115 = vunpack.c.l.b16 %v852
    %v1116 = vunpack.c.l.b16 %v853
    %v1117 = vunpack.c.l.b16 %v854
    %v1118 = vunpack.c.l.b16 %v855
    %v1119 = vunpack.c.l.b16 %v856
    %v1120 = vunpack.c.l.b16 %v857
    %v1121 = vunpack.c.l.b16 %v858
    %v1122 = vunpack.c.l.b16 %v859
    %v1123 = vpack.c.b16 %v996, %v995
    %v1124 = vpack.c.b16 %v998, %v997
    %v1125 = vpack.c.b16 %v1000, %v999
    %v1126 = vpack.c.b16 %v1002, %v1001
    %v1127 = vpack.c.b16 %v1004, %v1003
    %v1128 = vpack.c.b16 %v1006, %v1005
    %v1129 = vpack.c.b16 %v1008, %v1007
    %v1130 = vpack.c.b16 %v1010, %v1009
    %v1131 = vpack.c.b16 %v1012, %v1011
    %v1132 = vpack.c.b16 %v1014, %v1013
    %v1133 = vpack.c.b16 %v1016, %v1015
    %v1134 = vpack.c.b16 %v1018, %v1017
    %v1135 = vpack.c.b16 %v1020, %v1019
    %v1136 = vpack.c.b16 %v1022, %v1021
    %v1137 = vpack.c.b16 %v1024, %v1023
    %v1138 = vpack.c.b16 %v1026, %v1025
    %v1139 = vpack.c.b16 %v1028, %v1027
    %v1140 = vpack.c.b16 %v1030, %v1029
    %v1141 = vpack.c.b16 %v1032, %v1031
    %v1142 = vpack.c.b16 %v1034, %v1033
    %v1143 = vpack.c.b16 %v1036, %v1035
    %v1144 = vpack.c.b16 %v1038, %v1037
    %v1145 = vpack.c.b16 %v1040, %v1039
    %v1146 = vpack.c.b16 %v1042, %v1041
    %v1147 = vpack.c.b16 %v1044, %v1043
    %v1148 = vpack.c.b16 %v1046, %v1045
    %v1149 = vpack.c.b16 %v1048, %v1047
    %v1150 = vpack.c.b16 %v1050, %v1049
    %v1151 = vpack.c.b16 %v1052, %v1051
    %v1152 = vpack.c.b16 %v1054, %v1053
    %v1153 = vpack.c.b16 %v1056, %v1055
    %v1154 = vpack.c.b16 %v1058, %v1057
    %v1155 = vpack.c.b16 %v1060, %v1059
    %v1156 = vpack.c.b16 %v1062, %v1061
    %v1157 = vpack.c.b16 %v1064, %v1063
    %v1158 = vpack.c.b16 %v1066, %v1065
    %v1159 = vpack.c.b16 %v1068, %v1067
    %v1160 = vpack.c.b16 %v1070, %v1069
    %v1161 = vpack.c.b16 %v1072, %v1071
    %v1162 = vpack.c.b16 %v1074, %v1073
    %v1163 = vpack.c.b16 %v1076, %v1075
    %v1164 = vpack.c.b16 %v1078, %v1077
    %v1165 = vpack.c.b16 %v1080, %v1079
    %v1166 = vpack.c.b16 %v1082, %v1081
    %v1167 = vpack.c.b16 %v1084, %v1083
    %v1168 = vpack.c.b16 %v1086, %v1085
    %v1169 = vpack.c.b16 %v1088, %v1087
    %v1170 = vpack.c.b16 %v1090, %v1089
    %v1171 = vpack.c.b16 %v1092, %v1091
    %v1172 = vpack.c.b16 %v1094, %v1093
    %v1173 = vpack.c.b16 %v1096, %v1095
    %v1174 = vpack.c.b16 %v1098, %v1097
    %v1175 = vpack.c.b16 %v1100, %v1099
    %v1176 = vpack.c.b16 %v1102, %v1101
    %v1177 = vpack.c.b16 %v1104, %v1103
    %v1178 = vpack.c.b16 %v1106, %v1105
    %v1179 = vpack.c.b16 %v1108, %v1107
    %v1180 = vpack.c.b16 %v1110, %v1109
    %v1181 = vpack.c.b16 %v1112, %v1111
    %v1182 = vpack.c.b16 %v1114, %v1113
    %v1183 = vpack.c.b16 %v1116, %v1115
    %v1184 = vpack.c.b16 %v1118, %v1117
    %v1185 = vpack.c.b16 %v1120, %v1119
    %v1186 = vpack.c.b16 %v1122, %v1121
    %1251 = vmatprep.subr.bf16.mxu0 0
    %1252 = vmatpush1.bf16.msra.mxu0 %v1123
    %1253 = vmatprep.subr.bf16.mxu0 0
    %1254 = vmatpush1.bf16.msra.mxu0 %v1124
    %1255 = vmatprep.subr.bf16.mxu0 0
    %1256 = vmatpush1.bf16.msra.mxu0 %v1125
    %1257 = vmatprep.subr.bf16.mxu0 0
    %1258 = vmatpush1.bf16.msra.mxu0 %v1126
    %1259 = vmatprep.subr.bf16.mxu0 0
    %1260 = vmatpush1.bf16.msra.mxu0 %v1127
    %1261 = vmatprep.subr.bf16.mxu0 0
    %1262 = vmatpush1.bf16.msra.mxu0 %v1128
    %1263 = vmatprep.subr.bf16.mxu0 0
    %1264 = vmatpush1.bf16.msra.mxu0 %v1129
    %1265 = vmatprep.subr.bf16.mxu0 0
    %1266 = vmatpush1.bf16.msra.mxu0 %v1130
    %1267 = vmatprep.subr.bf16.mxu0 0
    %1268 = vmatpush1.bf16.msra.mxu0 %v1131
    %1269 = vmatprep.subr.bf16.mxu0 0
    %1270 = vmatpush1.bf16.msra.mxu0 %v1132
    %1271 = vmatprep.subr.bf16.mxu0 0
    %1272 = vmatpush1.bf16.msra.mxu0 %v1133
    %1273 = vmatprep.subr.bf16.mxu0 0
    %1274 = vmatpush1.bf16.msra.mxu0 %v1134
    %1275 = vmatprep.subr.bf16.mxu0 0
    %1276 = vmatpush1.bf16.msra.mxu0 %v1135
    %1277 = vmatprep.subr.bf16.mxu0 0
    %1278 = vmatpush1.bf16.msra.mxu0 %v1136
    %1279 = vmatprep.subr.bf16.mxu0 0
    %1280 = vmatpush1.bf16.msra.mxu0 %v1137
    %1281 = vmatprep.subr.bf16.mxu0 0
    %1282 = vmatpush1.bf16.msra.mxu0 %v1138
    %1283 = vmatprep.mubr.bf16.mxu0 %v725
    %1284 = vmatmul.mubr.bf16.gmra.mrb[0].mxu0 %v724
    %v1285 = vpop.f32.mrb[0].mxu0
    %v1286 = vadd.f32 %v865, %v1285
    %v1287 = vpop.f32.mrb[0].mxu0
    %v1288 = vpop.f32.mrb[0].mxu0
    %v1289 = vpop.f32.mrb[0].mxu0
    %1290 = vdwg.mxu0
    %1291 = vmatprep.subr.bf16.mxu0 0
    %1292 = vmatpush1.bf16.msra.mxu0 %v1139
    %1293 = vmatprep.subr.bf16.mxu0 0
    %1294 = vmatpush1.bf16.msra.mxu0 %v1140
    %1295 = vmatprep.subr.bf16.mxu0 0
    %1296 = vmatpush1.bf16.msra.mxu0 %v1141
    %1297 = vmatprep.subr.bf16.mxu0 0
    %1298 = vmatpush1.bf16.msra.mxu0 %v1142
    %1299 = vmatprep.subr.bf16.mxu0 0
    %1300 = vmatpush1.bf16.msra.mxu0 %v1143
    %1301 = vmatprep.subr.bf16.mxu0 0
    %1302 = vmatpush1.bf16.msra.mxu0 %v1144
    %1303 = vmatprep.subr.bf16.mxu0 0
    %1304 = vmatpush1.bf16.msra.mxu0 %v1145
    %1305 = vmatprep.subr.bf16.mxu0 0
    %1306 = vmatpush1.bf16.msra.mxu0 %v1146
    %1307 = vmatprep.subr.bf16.mxu0 0
    %1308 = vmatpush1.bf16.msra.mxu0 %v1147
    %1309 = vmatprep.subr.bf16.mxu0 0
    %1310 = vmatpush1.bf16.msra.mxu0 %v1148
    %1311 = vmatprep.subr.bf16.mxu0 0
    %1312 = vmatpush1.bf16.msra.mxu0 %v1149
    %1313 = vmatprep.subr.bf16.mxu0 0
    %1314 = vmatpush1.bf16.msra.mxu0 %v1150
    %1315 = vmatprep.subr.bf16.mxu0 0
    %1316 = vmatpush1.bf16.msra.mxu0 %v1151
    %1317 = vmatprep.subr.bf16.mxu0 0
    %1318 = vmatpush1.bf16.msra.mxu0 %v1152
    %1319 = vmatprep.subr.bf16.mxu0 0
    %1320 = vmatpush1.bf16.msra.mxu0 %v1153
    %1321 = vmatprep.subr.bf16.mxu0 0
    %1322 = vmatpush1.bf16.msra.mxu0 %v1154
    %1323 = vmatprep.mubr.bf16.mxu0 %v727
    %1324 = vmatmul.mubr.bf16.gmra.mrb[0].mxu0 %v726
    %v1325 = vpop.f32.mrb[0].mxu0
    %v1326 = vadd.f32 %v1286, %v1325
    %v1327 = vpop.f32.mrb[0].mxu0
    %v1328 = vpop.f32.mrb[0].mxu0
    %v1329 = vpop.f32.mrb[0].mxu0
    %1330 = vdwg.mxu0
    %1331 = vmatprep.subr.bf16.mxu0 0
    %1332 = vmatpush1.bf16.msra.mxu0 %v1155
    %1333 = vmatprep.subr.bf16.mxu0 0
    %1334 = vmatpush1.bf16.msra.mxu0 %v1156
    %1335 = vmatprep.subr.bf16.mxu0 0
    %1336 = vmatpush1.bf16.msra.mxu0 %v1157
    %1337 = vmatprep.subr.bf16.mxu0 0
    %1338 = vmatpush1.bf16.msra.mxu0 %v1158
    %1339 = vmatprep.subr.bf16.mxu0 0
    %1340 = vmatpush1.bf16.msra.mxu0 %v1159
    %1341 = vmatprep.subr.bf16.mxu0 0
    %1342 = vmatpush1.bf16.msra.mxu0 %v1160
    %1343 = vmatprep.subr.bf16.mxu0 0
    %1344 = vmatpush1.bf16.msra.mxu0 %v1161
    %1345 = vmatprep.subr.bf16.mxu0 0
    %1346 = vmatpush1.bf16.msra.mxu0 %v1162
    %1347 = vmatprep.subr.bf16.mxu0 0
    %1348 = vmatpush1.bf16.msra.mxu0 %v1163
    %1349 = vmatprep.subr.bf16.mxu0 0
    %1350 = vmatpush1.bf16.msra.mxu0 %v1164
    %1351 = vmatprep.subr.bf16.mxu0 0
    %1352 = vmatpush1.bf16.msra.mxu0 %v1165
    %1353 = vmatprep.subr.bf16.mxu0 0
    %1354 = vmatpush1.bf16.msra.mxu0 %v1166
    %1355 = vmatprep.subr.bf16.mxu0 0
    %1356 = vmatpush1.bf16.msra.mxu0 %v1167
    %1357 = vmatprep.subr.bf16.mxu0 0
    %1358 = vmatpush1.bf16.msra.mxu0 %v1168
    %1359 = vmatprep.subr.bf16.mxu0 0
    %1360 = vmatpush1.bf16.msra.mxu0 %v1169
    %1361 = vmatprep.subr.bf16.mxu0 0
    %1362 = vmatpush1.bf16.msra.mxu0 %v1170
    %1363 = vmatprep.mubr.bf16.mxu0 %v729
    %1364 = vmatmul.mubr.bf16.gmra.mrb[0].mxu0 %v728
    %v1365 = vpop.f32.mrb[0].mxu0
    %v1366 = vadd.f32 %v1326, %v1365
    %v1367 = vpop.f32.mrb[0].mxu0
    %v1368 = vpop.f32.mrb[0].mxu0
    %v1369 = vpop.f32.mrb[0].mxu0
    %1370 = vdwg.mxu0
    %1371 = vmatprep.subr.bf16.mxu0 0
    %1372 = vmatpush1.bf16.msra.mxu0 %v1171
    %1373 = vmatprep.subr.bf16.mxu0 0
    %1374 = vmatpush1.bf16.msra.mxu0 %v1172
    %1375 = vmatprep.subr.bf16.mxu0 0
    %1376 = vmatpush1.bf16.msra.mxu0 %v1173
    %1377 = vmatprep.subr.bf16.mxu0 0
    %1378 = vmatpush1.bf16.msra.mxu0 %v1174
    %1379 = vmatprep.subr.bf16.mxu0 0
    %1380 = vmatpush1.bf16.msra.mxu0 %v1175
    %1381 = vmatprep.subr.bf16.mxu0 0
    %1382 = vmatpush1.bf16.msra.mxu0 %v1176
    %1383 = vmatprep.subr.bf16.mxu0 0
    %1384 = vmatpush1.bf16.msra.mxu0 %v1177
    %1385 = vmatprep.subr.bf16.mxu0 0
    %1386 = vmatpush1.bf16.msra.mxu0 %v1178
    %1387 = vmatprep.subr.bf16.mxu0 0
    %1388 = vmatpush1.bf16.msra.mxu0 %v1179
    %1389 = vmatprep.subr.bf16.mxu0 0
    %1390 = vmatpush1.bf16.msra.mxu0 %v1180
    %1391 = vmatprep.subr.bf16.mxu0 0
    %1392 = vmatpush1.bf16.msra.mxu0 %v1181
    %1393 = vmatprep.subr.bf16.mxu0 0
    %1394 = vmatpush1.bf16.msra.mxu0 %v1182
    %1395 = vmatprep.subr.bf16.mxu0 0
    %1396 = vmatpush1.bf16.msra.mxu0 %v1183
    %1397 = vmatprep.subr.bf16.mxu0 0
    %1398 = vmatpush1.bf16.msra.mxu0 %v1184
    %1399 = vmatprep.subr.bf16.mxu0 0
    %1400 = vmatpush1.bf16.msra.mxu0 %v1185
    %1401 = vmatprep.subr.bf16.mxu0 0
    %1402 = vmatpush1.bf16.msra.mxu0 %v1186
    %1403 = vmatprep.mubr.bf16.mxu0 %v731
    %1404 = vmatmul.mubr.bf16.gmra.mrb[0].mxu0 %v730
    %v1405 = vpop.f32.mrb[0].mxu0
    %v1406 = vadd.f32 %v1366, %v1405
    %v1407 = vpop.f32.mrb[0].mxu0
    %v1408 = vpop.f32.mrb[0].mxu0
    %v1409 = vpop.f32.mrb[0].mxu0
    %1410 = vdwg.mxu0
    %v1411 = vmul.f32 %v1406, 0.5
    %v1412 = vmul.f32 %v1406, 0.70710677
    %v1413 = verf.f32.pop %v1412
    %v1414 = vadd.f32 %v1413, 1.0
    %v1415 = vmul.f32 %v1411, %v1414
    %v1416 = vpack.c.bf16 %v1415, %v1415
    %v1417 = vld [vmem:[#allocation10] sm:$0xf]
    %v1418 = vld [vmem:[#allocation10 + $0x4] sm:$0xf]
    %v1419 = vld [vmem:[#allocation10 + $0x8] sm:$0xf]
    %v1420 = vld [vmem:[#allocation10 + $0xc] sm:$0xf]
    %v1421 = vld [vmem:[#allocation10 + $0x10] sm:$0xf]
    %v1422 = vld [vmem:[#allocation10 + $0x14] sm:$0xf]
    %v1423 = vld [vmem:[#allocation10 + $0x18] sm:$0xf]
    %v1424 = vld [vmem:[#allocation10 + $0x1c] sm:$0xf]
    %v1425 = vld [vmem:[#allocation10 + $0x20] sm:$0xf]
    %v1426 = vld [vmem:[#allocation10 + $0x24] sm:$0xf]
    %v1427 = vld [vmem:[#allocation10 + $0x28] sm:$0xf]
    %v1428 = vld [vmem:[#allocation10 + $0x2c] sm:$0xf]
    %v1429 = vld [vmem:[#allocation10 + $0x30] sm:$0xf]
    %v1430 = vld [vmem:[#allocation10 + $0x34] sm:$0xf]
    %v1431 = vld [vmem:[#allocation10 + $0x38] sm:$0xf]
    %v1432 = vld [vmem:[#allocation10 + $0x3c] sm:$0xf]
    %v1433 = vld [vmem:[%s6] sm:$0x1]
    %v1435 = vlaneseq
    %v1436 = vshrl.u32 %v1435, 7
    %v1437 = vsub.s32 0, %v1436
    %v1438 = vrot.slane %v1433, %v1437
    %v1456 = vunpack.c.l.b16 %v1417
    %v1457 = vunpack.c.l.b16 %v1418
    %v1458 = vunpack.c.l.b16 %v1419
    %v1459 = vunpack.c.l.b16 %v1420
    %v1460 = vunpack.c.l.b16 %v1421
    %v1461 = vunpack.c.l.b16 %v1422
    %v1462 = vunpack.c.l.b16 %v1423
    %v1463 = vunpack.c.l.b16 %v1424
    %v1464 = vunpack.c.l.b16 %v1425
    %v1465 = vunpack.c.l.b16 %v1426
    %v1466 = vunpack.c.l.b16 %v1427
    %v1467 = vunpack.c.l.b16 %v1428
    %v1468 = vunpack.c.l.b16 %v1429
    %v1469 = vunpack.c.l.b16 %v1430
    %v1470 = vunpack.c.l.b16 %v1431
    %v1471 = vunpack.c.l.b16 %v1432
    %v1472 = vpack.c.b16 %v1457, %v1456
    %v1473 = vpack.c.b16 %v1459, %v1458
    %v1474 = vpack.c.b16 %v1461, %v1460
    %v1475 = vpack.c.b16 %v1463, %v1462
    %v1476 = vpack.c.b16 %v1465, %v1464
    %v1477 = vpack.c.b16 %v1467, %v1466
    %v1478 = vpack.c.b16 %v1469, %v1468
    %v1479 = vpack.c.b16 %v1471, %v1470
    %1488 = vmatprep.subr.bf16.mxu0 0
    %1489 = vmatpush1.bf16.msra.mxu0 %v1472
    %1490 = vmatprep.subr.bf16.mxu0 0
    %1491 = vmatpush1.bf16.msra.mxu0 %v1473
    %1492 = vmatprep.subr.bf16.mxu0 0
    %1493 = vmatpush1.bf16.msra.mxu0 %v1474
    %1494 = vmatprep.subr.bf16.mxu0 0
    %1495 = vmatpush1.bf16.msra.mxu0 %v1475
    %1496 = vmatprep.subr.bf16.mxu0 0
    %1497 = vmatpush1.bf16.msra.mxu0 %v1476
    %1498 = vmatprep.subr.bf16.mxu0 0
    %1499 = vmatpush1.bf16.msra.mxu0 %v1477
    %1500 = vmatprep.subr.bf16.mxu0 0
    %1501 = vmatpush1.bf16.msra.mxu0 %v1478
    %1502 = vmatprep.subr.bf16.mxu0 0
    %1503 = vmatpush1.bf16.msra.mxu0 %v1479
    %1504 = vmatprep.subr.bf16.mxu0 0
    %1505 = vmatpush1.bf16.msra.mxu0 0
    %1506 = vmatprep.subr.bf16.mxu0 0
    %1507 = vmatpush1.bf16.msra.mxu0 0
    %1508 = vmatprep.subr.bf16.mxu0 0
    %1509 = vmatpush1.bf16.msra.mxu0 0
    %1510 = vmatprep.subr.bf16.mxu0 0
    %1511 = vmatpush1.bf16.msra.mxu0 0
    %1512 = vmatprep.subr.bf16.mxu0 0
    %1513 = vmatpush1.bf16.msra.mxu0 0
    %1514 = vmatprep.subr.bf16.mxu0 0
    %1515 = vmatpush1.bf16.msra.mxu0 0
    %1516 = vmatprep.subr.bf16.mxu0 0
    %1517 = vmatpush1.bf16.msra.mxu0 0
    %1518 = vmatprep.subr.bf16.mxu0 0
    %1519 = vmatpush1.bf16.msra.mxu0 0
    %1520 = vmatprep.mubr.bf16.mxu0 0
    %1521 = vmatmul.mubr.bf16.gmra.mrb[0].mxu0 %v1416
    %v1522 = vpop.f32.mrb[0].mxu0
    %v1523 = vadd.f32 %v1438, %v1522
    %v1524 = vpop.f32.mrb[0].mxu0
    %v1525 = vpop.f32.mrb[0].mxu0
    %v1526 = vpop.f32.mrb[0].mxu0
    %1527 = vdwg.mxu0
    %1528 = vst [vmem:[#allocation11] sm:$0xff] %v1523
    // Predicated region
    $region50: #{tpu_custom_call.1} parent=1 // pred_check
      _
    $region51: #{tpu_custom_call.1} parent=1 // pred_check_branch
      %1530 = sbr.rel (0) target = $region53
    $region52: #{tpu_custom_call.1} parent=1 // pred_region
      %s1532 = ssub.s32 128, 128
      %1533 = vsyncadd [#allocation4], %s1532
      %s1535 = sshll.u32 [#allocation11], 4
      %s1536 = int_to_ptr.vmem [resolvable:$true] %s1535
      %1538 = dma.vmem_to_hbm [thread:$0]  %s1536, 128, %s7, [#allocation4]
    $region53: #{tpu_custom_call.1} parent=1 // pred_fallthru
      _
    // Predicated region
    $region54: #{tpu_custom_call.1} parent=1 // pred_check
      _
    $region55: #{tpu_custom_call.1} parent=1 // pred_check_branch
      %1540 = sbr.rel (0) target = $region57
    $region56: #{tpu_custom_call.1} parent=1 // pred_region
      %1541 = dma.done [#allocation4], 128
    $region57: #{tpu_custom_call.1} parent=1 // pred_fallthru
      _
    %1542 = vsyncpa [#allocation3], 1
    %1543 = vsyncpa [#allocation6], 1
    %1544 = vsyncpa [#allocation9], 1
    %1545 = vsyncpa [#allocation4], 1

// kernel: tpu_custom_call.1
$region0: #{tpu_custom_call.1}
  #allocation0 [shape = 'u32[]', space=smem, size = 0x4, offset = 0x4, fixed_abs, tag = 'smem constant byte address 0x4 - core index']
  #allocation1 [shape = 'u32[144,128]{1,0:T(1,128)}', space=vmem, size = 0x12000, scoped, tag = 'internal scratch']
  %s0 = inlined_call_operand.hbm [shape: f32[8,128], index: 0, kind: input, shape index: {}]
  %s1 = inlined_call_operand.hbm [shape: bf16[128,1024], index: 1, kind: input, shape index: {}]
  %s2 = inlined_call_operand.hbm [shape: f32[1,1024], index: 2, kind: input, shape index: {}]
  %s3 = inlined_call_operand.hbm [shape: bf16[1024,128], index: 3, kind: input, shape index: {}]
  %s4 = inlined_call_operand.vmem [shape: f32[1,128], index: 4, kind: input, shape index: {}]
  %s5 = inlined_call_operand.hbm [shape: bf16[128,128], index: 5, kind: input, shape index: {}]
  %s6 = inlined_call_operand.vmem [shape: f32[1,128], index: 6, kind: input, shape index: {}]
  %s7 = inlined_call_operand.hbm [shape: f32[8,128], index: 7, kind: output, shape index: {}]
  %s8 = sld [smem:[#allocation0]]
  $region58: #{tpu_custom_call.1} parent=0
    _
  %s10 = ssub.s32 1, %s8
  %s11 = scalar_select 0, %s10, %s8
  $region1: #{tpu_custom_call.1} parent=0
    #allocation2 [shape = 'u8[4096]{0}', space=vmem, size = 0x1000, scoped, tag = 'input window, operand 0, single buffered']
    #allocation3 [shape = 's32[1]{0}', space=sflag, size = 0x4, scoped, tag = 'scoped memory for tpu_custom_call.1']
    #allocation4 [shape = 's32[1]{0}', space=sflag, size = 0x4, scoped, tag = 'scoped memory for tpu_custom_call.1']
    #allocation5 [shape = 'u8[262144]{0}', space=vmem, size = 0x40000, scoped, tag = 'input window, operand 1, single buffered']
    #allocation6 [shape = 's32[1]{0}', space=sflag, size = 0x4, scoped, tag = 'scoped memory for tpu_custom_call.1']
    #allocation7 [shape = 'u8[4096]{0}', space=vmem, size = 0x1000, scoped, tag = 'input window, operand 2, single buffered']
    #allocation8 [shape = 'u8[262144]{0}', space=vmem, size = 0x40000, scoped, tag = 'input window, operand 3, single buffered']
    #allocation9 [shape = 's32[1]{0}', space=sflag, size = 0x4, scoped, tag = 'scoped memory for tpu_custom_call.1']
    #allocation10 [shape = 'u8[32768]{0}', space=vmem, size = 0x8000, scoped, tag = 'input window, operand 5, single buffered']
    #allocation11 [shape = 'u8[4096]{0}', space=vmem, size = 0x1000, scoped, tag = 'output window, operand 0, single buffered']
    %12 = vsyncpa [#allocation3], 0
    %13 = vsyncpa [#allocation6], 0
    %14 = vsyncpa [#allocation9], 0
    %15 = vsyncpa [#allocation4], 0
    // Predicated region
    $region2: #{tpu_custom_call.1} parent=1 // pred_check
      _
    $region3: #{tpu_custom_call.1} parent=1 // pred_check_branch
      %17 = sbr.rel (0) target = $region5
    $region4: #{tpu_custom_call.1} parent=1 // pred_region
      %s19 = ssub.s32 128, 128
      %20 = vsyncadd [#allocation3], %s19
      %s22 = sshll.u32 [#allocation2], 4
      %s23 = int_to_ptr.vmem [resolvable:$true] %s22
      %25 = dma.hbm_to_vmem [thread:$0]  %s0, 128, %s23, [#allocation3]
    $region5: #{tpu_custom_call.1} parent=1 // pred_fallthru
      _
    // Predicated region
    $region6: #{tpu_custom_call.1} parent=1 // pred_check
      _
    $region7: #{tpu_custom_call.1} parent=1 // pred_check_branch
      %27 = sbr.rel (0) target = $region9
    $region8: #{tpu_custom_call.1} parent=1 // pred_region
      %s29 = ssub.s32 8192, 8192
      %30 = vsyncadd [#allocation6], %s29
      %s31 = sshll.u32 [#allocation5], 4
      %s32 = int_to_ptr.vmem [resolvable:$true] %s31
      %37 = dma.hbm_to_vmem [thread:$0]  %s1, 8192, %s32, [#allocation6], 512, 512, 32
    $region9: #{tpu_custom_call.1} parent=1 // pred_fallthru
      _
    // Predicated region
    $region10: #{tpu_custom_call.1} parent=1 // pred_check
      _
    $region11: #{tpu_custom_call.1} parent=1 // pred_check_branch
      %39 = sbr.rel (0) target = $region13
    $region12: #{tpu_custom_call.1} parent=1 // pred_region
      %s41 = ssub.s32 128, 128
      %42 = vsyncadd [#allocation6], %s41
      %s44 = sshll.u32 [#allocation7], 4
      %s45 = int_to_ptr.vmem [resolvable:$true] %s44
      %47 = dma.hbm_to_vmem [thread:$0]  %s2, 128, %s45, [#allocation6]
    $region13: #{tpu_custom_call.1} parent=1 // pred_fallthru
      _
    // Predicated region
    $region14: #{tpu_custom_call.1} parent=1 // pred_check
      _
    $region15: #{tpu_custom_call.1} parent=1 // pred_check_branch
      %49 = sbr.rel (0) target = $region17
    $region16: #{tpu_custom_call.1} parent=1 // pred_region
      %s51 = ssub.s32 8192, 8192
      %52 = vsyncadd [#allocation9], %s51
      %s53 = sshll.u32 [#allocation8], 4
      %s54 = int_to_ptr.vmem [resolvable:$true] %s53
      %59 = dma.hbm_to_vmem [thread:$0]  %s3, 8192, %s54, [#allocation9], 64, 64, 4
    $region17: #{tpu_custom_call.1} parent=1 // pred_fallthru
      _
    // Predicated region
    $region18: #{tpu_custom_call.1} parent=1 // pred_check
      _
    $region19: #{tpu_custom_call.1} parent=1 // pred_check_branch
      %61 = sbr.rel (0) target = $region21
    $region20: #{tpu_custom_call.1} parent=1 // pred_region
      _
    $region21: #{tpu_custom_call.1} parent=1 // pred_fallthru
      _
    // Predicated region
    $region22: #{tpu_custom_call.1} parent=1 // pred_check
      _
    $region23: #{tpu_custom_call.1} parent=1 // pred_check_branch
      %63 = sbr.rel (0) target = $region25
    $region24: #{tpu_custom_call.1} parent=1 // pred_region
      %s65 = ssub.s32 1024, 1024
      %66 = vsyncadd [#allocation9], %s65
      %s67 = sshll.u32 [#allocation10], 4
      %s68 = int_to_ptr.vmem [resolvable:$true] %s67
      %73 = dma.hbm_to_vmem [thread:$0]  %s5, 1024, %s68, [#allocation9], 64, 64, 4
    $region25: #{tpu_custom_call.1} parent=1 // pred_fallthru
      _
    // Predicated region
    $region26: #{tpu_custom_call.1} parent=1 // pred_check
      _
    $region27: #{tpu_custom_call.1} parent=1 // pred_check_branch
      %75 = sbr.rel (0) target = $region29
    $region28: #{tpu_custom_call.1} parent=1 // pred_region
      _
    $region29: #{tpu_custom_call.1} parent=1 // pred_fallthru
      _
    // Predicated region
    $region30: #{tpu_custom_call.1} parent=1 // pred_check
      _
    $region31: #{tpu_custom_call.1} parent=1 // pred_check_branch
      %77 = sbr.rel (0) target = $region33
    $region32: #{tpu_custom_call.1} parent=1 // pred_region
      %78 = dma.done [#allocation3], 128
    $region33: #{tpu_custom_call.1} parent=1 // pred_fallthru
      _
    // Predicated region
    $region34: #{tpu_custom_call.1} parent=1 // pred_check
      _
    $region35: #{tpu_custom_call.1} parent=1 // pred_check_branch
      %80 = sbr.rel (0) target = $region37
    $region36: #{tpu_custom_call.1} parent=1 // pred_region
      %81 = dma.done [#allocation6], 8192
    $region37: #{tpu_custom_call.1} parent=1 // pred_fallthru
      _
    // Predicated region
    $region38: #{tpu_custom_call.1} parent=1 // pred_check
      _
    $region39: #{tpu_custom_call.1} parent=1 // pred_check_branch
      %83 = sbr.rel (0) target = $region41
    $region40: #{tpu_custom_call.1} parent=1 // pred_region
      %84 = dma.done [#allocation6], 128
    $region41: #{tpu_custom_call.1} parent=1 // pred_fallthru
      _
    // Predicated region
    $region42: #{tpu_custom_call.1} parent=1 // pred_check
      _
    $region43: #{tpu_custom_call.1} parent=1 // pred_check_branch
      %86 = sbr.rel (0) target = $region45
    $region44: #{tpu_custom_call.1} parent=1 // pred_region
      %87 = dma.done [#allocation9], 8192
    $region45: #{tpu_custom_call.1} parent=1 // pred_fallthru
      _
    // Predicated region
    $region46: #{tpu_custom_call.1} parent=1 // pred_check
      _
    $region47: #{tpu_custom_call.1} parent=1 // pred_check_branch
      %89 = sbr.rel (0) target = $region49
    $region48: #{tpu_custom_call.1} parent=1 // pred_region
      %90 = dma.done [#allocation9], 1024
    $region49: #{tpu_custom_call.1} parent=1 // pred_fallthru
      _
    %v92 = vld [vmem:[#allocation2] sm:$0xff]
    %v93 = vpack.c.bf16 %v92, %v92
    %v94 = vld [vmem:[#allocation5] sm:$0xff]
    %v95 = vld [vmem:[#allocation5 + $0x8] sm:$0xff]
    %v96 = vld [vmem:[#allocation5 + $0x10] sm:$0xff]
    %v97 = vld [vmem:[#allocation5 + $0x18] sm:$0xff]
    %v98 = vld [vmem:[#allocation5 + $0x20] sm:$0xff]
    %v99 = vld [vmem:[#allocation5 + $0x28] sm:$0xff]
    %v100 = vld [vmem:[#allocation5 + $0x30] sm:$0xff]
    %v101 = vld [vmem:[#allocation5 + $0x38] sm:$0xff]
    %v102 = vld [vmem:[#allocation5 + $0x40] sm:$0xff]
    %v103 = vld [vmem:[#allocation5 + $0x48] sm:$0xff]
    %v104 = vld [vmem:[#allocation5 + $0x50] sm:$0xff]
    %v105 = vld [vmem:[#allocation5 + $0x58] sm:$0xff]
    %v106 = vld [vmem:[#allocation5 + $0x60] sm:$0xff]
    %v107 = vld [vmem:[#allocation5 + $0x68] sm:$0xff]
    %v108 = vld [vmem:[#allocation5 + $0x70] sm:$0xff]
    %v109 = vld [vmem:[#allocation5 + $0x78] sm:$0xff]
    %v110 = vld [vmem:[#allocation5 + $0x80] sm:$0xff]
    %v111 = vld [vmem:[#allocation5 + $0x88] sm:$0xff]
    %v112 = vld [vmem:[#allocation5 + $0x90] sm:$0xff]
    %v113 = vld [vmem:[#allocation5 + $0x98] sm:$0xff]
    %v114 = vld [vmem:[#allocation5 + $0xa0] sm:$0xff]
    %v115 = vld [vmem:[#allocation5 + $0xa8] sm:$0xff]
    %v116 = vld [vmem:[#allocation5 + $0xb0] sm:$0xff]
    %v117 = vld [vmem:[#allocation5 + $0xb8] sm:$0xff]
    %v118 = vld [vmem:[#allocation5 + $0xc0] sm:$0xff]
    %v119 = vld [vmem:[#allocation5 + $0xc8] sm:$0xff]
    %v120 = vld [vmem:[#allocation5 + $0xd0] sm:$0xff]
    %v121 = vld [vmem:[#allocation5 + $0xd8] sm:$0xff]
    %v122 = vld [vmem:[#allocation5 + $0xe0] sm:$0xff]
    %v123 = vld [vmem:[#allocation5 + $0xe8] sm:$0xff]
    %v124 = vld [vmem:[#allocation5 + $0xf0] sm:$0xff]
    %v125 = vld [vmem:[#allocation5 + $0xf8] sm:$0xff]
    %v126 = vld [vmem:[#allocation5 + $0x100] sm:$0xff]
    %v127 = vld [vmem:[#allocation5 + $0x108] sm:$0xff]
    %v128 = vld [vmem:[#allocation5 + $0x110] sm:$0xff]
    %v129 = vld [vmem:[#allocation5 + $0x118] sm:$0xff]
    %v130 = vld [vmem:[#allocation5 + $0x120] sm:$0xff]
    %v131 = vld [vmem:[#allocation5 + $0x128] sm:$0xff]
    %v132 = vld [vmem:[#allocation5 + $0x130] sm:$0xff]
    %v133 = vld [vmem:[#allocation5 + $0x138] sm:$0xff]
    %v134 = vld [vmem:[#allocation5 + $0x140] sm:$0xff]
    %v135 = vld [vmem:[#allocation5 + $0x148] sm:$0xff]
    %v136 = vld [vmem:[#allocation5 + $0x150] sm:$0xff]
    %v137 = vld [vmem:[#allocation5 + $0x158] sm:$0xff]
    %v138 = vld [vmem:[#allocation5 + $0x160] sm:$0xff]
    %v139 = vld [vmem:[#allocation5 + $0x168] sm:$0xff]
    %v140 = vld [vmem:[#allocation5 + $0x170] sm:$0xff]
    %v141 = vld [vmem:[#allocation5 + $0x178] sm:$0xff]
    %v142 = vld [vmem:[#allocation5 + $0x180] sm:$0xff]
    %v143 = vld [vmem:[#allocation5 + $0x188] sm:$0xff]
    %v144 = vld [vmem:[#allocation5 + $0x190] sm:$0xff]
    %v145 = vld [vmem:[#allocation5 + $0x198] sm:$0xff]
    %v146 = vld [vmem:[#allocation5 + $0x1a0] sm:$0xff]
    %v147 = vld [vmem:[#allocation5 + $0x1a8] sm:$0xff]
    %v148 = vld [vmem:[#allocation5 + $0x1b0] sm:$0xff]
    %v149 = vld [vmem:[#allocation5 + $0x1b8] sm:$0xff]
    %v150 = vld [vmem:[#allocation5 + $0x1c0] sm:$0xff]
    %v151 = vld [vmem:[#allocation5 + $0x1c8] sm:$0xff]
    %v152 = vld [vmem:[#allocation5 + $0x1d0] sm:$0xff]
    %v153 = vld [vmem:[#allocation5 + $0x1d8] sm:$0xff]
    %v154 = vld [vmem:[#allocation5 + $0x1e0] sm:$0xff]
    %v155 = vld [vmem:[#allocation5 + $0x1e8] sm:$0xff]
    %v156 = vld [vmem:[#allocation5 + $0x1f0] sm:$0xff]
    %v157 = vld [vmem:[#allocation5 + $0x1f8] sm:$0xff]
    %v158 = vld [vmem:[#allocation7] sm:$0xff]
    %v160 = vlaneseq
    %v161 = vshrl.u32 %v160, 7
    %v162 = vsub.s32 0, %v161
    %v163 = vrot.slane %v158, %v162
    %v164 = vlaneseq
    %v165 = vshrl.u32 %v164, 7
    %v166 = vsub.s32 1, %v165
    %v167 = vrot.slane %v158, %v166
    %v168 = vlaneseq
    %v169 = vshrl.u32 %v168, 7
    %v170 = vsub.s32 2, %v169
    %v171 = vrot.slane %v158, %v170
    %v172 = vlaneseq
    %v173 = vshrl.u32 %v172, 7
    %v174 = vsub.s32 3, %v173
    %v175 = vrot.slane %v158, %v174
    %v176 = vlaneseq
    %v177 = vshrl.u32 %v176, 7
    %v178 = vsub.s32 4, %v177
    %v179 = vrot.slane %v158, %v178
    %v180 = vlaneseq
    %v181 = vshrl.u32 %v180, 7
    %v182 = vsub.s32 5, %v181
    %v183 = vrot.slane %v158, %v182
    %v184 = vlaneseq
    %v185 = vshrl.u32 %v184, 7
    %v186 = vsub.s32 6, %v185
    %v187 = vrot.slane %v158, %v186
    %v188 = vlaneseq
    %v189 = vshrl.u32 %v188, 7
    %v190 = vsub.s32 7, %v189
    %v191 = vrot.slane %v158, %v190
    %v264 = vunpack.c.l.b16 %v94
    %v265 = vunpack.c.h.b16 %v94
    %v266 = vunpack.c.l.b16 %v95
    %v267 = vunpack.c.h.b16 %v95
    %v268 = vunpack.c.l.b16 %v96
    %v269 = vunpack.c.h.b16 %v96
    %v270 = vunpack.c.l.b16 %v97
    %v271 = vunpack.c.h.b16 %v97
    %v272 = vunpack.c.l.b16 %v98
    %v273 = vunpack.c.h.b16 %v98
    %v274 = vunpack.c.l.b16 %v99
    %v275 = vunpack.c.h.b16 %v99
    %v276 = vunpack.c.l.b16 %v100
    %v277 = vunpack.c.h.b16 %v100
    %v278 = vunpack.c.l.b16 %v101
    %v279 = vunpack.c.h.b16 %v101
    %v280 = vunpack.c.l.b16 %v102
    %v281 = vunpack.c.h.b16 %v102
    %v282 = vunpack.c.l.b16 %v103
    %v283 = vunpack.c.h.b16 %v103
    %v284 = vunpack.c.l.b16 %v104
    %v285 = vunpack.c.h.b16 %v104
    %v286 = vunpack.c.l.b16 %v105
    %v287 = vunpack.c.h.b16 %v105
    %v288 = vunpack.c.l.b16 %v106
    %v289 = vunpack.c.h.b16 %v106
    %v290 = vunpack.c.l.b16 %v107
    %v291 = vunpack.c.h.b16 %v107
    %v292 = vunpack.c.l.b16 %v108
    %v293 = vunpack.c.h.b16 %v108
    %v294 = vunpack.c.l.b16 %v109
    %v295 = vunpack.c.h.b16 %v109
    %v296 = vunpack.c.l.b16 %v110
    %v297 = vunpack.c.h.b16 %v110
    %v298 = vunpack.c.l.b16 %v111
    %v299 = vunpack.c.h.b16 %v111
    %v300 = vunpack.c.l.b16 %v112
    %v301 = vunpack.c.h.b16 %v112
    %v302 = vunpack.c.l.b16 %v113
    %v303 = vunpack.c.h.b16 %v113
    %v304 = vunpack.c.l.b16 %v114
    %v305 = vunpack.c.h.b16 %v114
    %v306 = vunpack.c.l.b16 %v115
    %v307 = vunpack.c.h.b16 %v115
    %v308 = vunpack.c.l.b16 %v116
    %v309 = vunpack.c.h.b16 %v116
    %v310 = vunpack.c.l.b16 %v117
    %v311 = vunpack.c.h.b16 %v117
    %v312 = vunpack.c.l.b16 %v118
    %v313 = vunpack.c.h.b16 %v118
    %v314 = vunpack.c.l.b16 %v119
    %v315 = vunpack.c.h.b16 %v119
    %v316 = vunpack.c.l.b16 %v120
    %v317 = vunpack.c.h.b16 %v120
    %v318 = vunpack.c.l.b16 %v121
    %v319 = vunpack.c.h.b16 %v121
    %v320 = vunpack.c.l.b16 %v122
    %v321 = vunpack.c.h.b16 %v122
    %v322 = vunpack.c.l.b16 %v123
    %v323 = vunpack.c.h.b16 %v123
    %v324 = vunpack.c.l.b16 %v124
    %v325 = vunpack.c.h.b16 %v124
    %v326 = vunpack.c.l.b16 %v125
    %v327 = vunpack.c.h.b16 %v125
    %v328 = vunpack.c.l.b16 %v126
    %v329 = vunpack.c.h.b16 %v126
    %v330 = vunpack.c.l.b16 %v127
    %v331 = vunpack.c.h.b16 %v127
    %v332 = vunpack.c.l.b16 %v128
    %v333 = vunpack.c.h.b16 %v128
    %v334 = vunpack.c.l.b16 %v129
    %v335 = vunpack.c.h.b16 %v129
    %v336 = vunpack.c.l.b16 %v130
    %v337 = vunpack.c.h.b16 %v130
    %v338 = vunpack.c.l.b16 %v131
    %v339 = vunpack.c.h.b16 %v131
    %v340 = vunpack.c.l.b16 %v132
    %v341 = vunpack.c.h.b16 %v132
    %v342 = vunpack.c.l.b16 %v133
    %v343 = vunpack.c.h.b16 %v133
    %v344 = vunpack.c.l.b16 %v134
    %v345 = vunpack.c.h.b16 %v134
    %v346 = vunpack.c.l.b16 %v135
    %v347 = vunpack.c.h.b16 %v135
    %v348 = vunpack.c.l.b16 %v136
    %v349 = vunpack.c.h.b16 %v136
    %v350 = vunpack.c.l.b16 %v137
    %v351 = vunpack.c.h.b16 %v137
    %v352 = vunpack.c.l.b16 %v138
    %v353 = vunpack.c.h.b16 %v138
    %v354 = vunpack.c.l.b16 %v139
    %v355 = vunpack.c.h.b16 %v139
    %v356 = vunpack.c.l.b16 %v140
    %v357 = vunpack.c.h.b16 %v140
    %v358 = vunpack.c.l.b16 %v141
    %v359 = vunpack.c.h.b16 %v141
    %v360 = vunpack.c.l.b16 %v142
    %v361 = vunpack.c.h.b16 %v142
    %v362 = vunpack.c.l.b16 %v143
    %v363 = vunpack.c.h.b16 %v143
    %v364 = vunpack.c.l.b16 %v144
    %v365 = vunpack.c.h.b16 %v144
    %v366 = vunpack.c.l.b16 %v145
    %v367 = vunpack.c.h.b16 %v145
    %v368 = vunpack.c.l.b16 %v146
    %v369 = vunpack.c.h.b16 %v146
    %v370 = vunpack.c.l.b16 %v147
    %v371 = vunpack.c.h.b16 %v147
    %v372 = vunpack.c.l.b16 %v148
    %v373 = vunpack.c.h.b16 %v148
    %v374 = vunpack.c.l.b16 %v149
    %v375 = vunpack.c.h.b16 %v149
    %v376 = vunpack.c.l.b16 %v150
    %v377 = vunpack.c.h.b16 %v150
    %v378 = vunpack.c.l.b16 %v151
    %v379 = vunpack.c.h.b16 %v151
    %v380 = vunpack.c.l.b16 %v152
    %v381 = vunpack.c.h.b16 %v152
    %v382 = vunpack.c.l.b16 %v153
    %v383 = vunpack.c.h.b16 %v153
    %v384 = vunpack.c.l.b16 %v154
    %v385 = vunpack.c.h.b16 %v154
    %v386 = vunpack.c.l.b16 %v155
    %v387 = vunpack.c.h.b16 %v155
    %v388 = vunpack.c.l.b16 %v156
    %v389 = vunpack.c.h.b16 %v156
    %v390 = vunpack.c.l.b16 %v157
    %v391 = vunpack.c.h.b16 %v157
    %v392 = vpack.c.b16 %v272, %v264
    %v393 = vpack.c.b16 %v273, %v265
    %v394 = vpack.c.b16 %v274, %v266
    %v395 = vpack.c.b16 %v275, %v267
    %v396 = vpack.c.b16 %v276, %v268
    %v397 = vpack.c.b16 %v277, %v269
    %v398 = vpack.c.b16 %v278, %v270
    %v399 = vpack.c.b16 %v279, %v271
    %v400 = vpack.c.b16 %v288, %v280
    %v401 = vpack.c.b16 %v289, %v281
    %v402 = vpack.c.b16 %v290, %v282
    %v403 = vpack.c.b16 %v291, %v283
    %v404 = vpack.c.b16 %v292, %v284
    %v405 = vpack.c.b16 %v293, %v285
    %v406 = vpack.c.b16 %v294, %v286
    %v407 = vpack.c.b16 %v295, %v287
    %v408 = vpack.c.b16 %v304, %v296
    %v409 = vpack.c.b16 %v305, %v297
    %v410 = vpack.c.b16 %v306, %v298
    %v411 = vpack.c.b16 %v307, %v299
    %v412 = vpack.c.b16 %v308, %v300
    %v413 = vpack.c.b16 %v309, %v301
    %v414 = vpack.c.b16 %v310, %v302
    %v415 = vpack.c.b16 %v311, %v303
    %v416 = vpack.c.b16 %v320, %v312
    %v417 = vpack.c.b16 %v321, %v313
    %v418 = vpack.c.b16 %v322, %v314
    %v419 = vpack.c.b16 %v323, %v315
    %v420 = vpack.c.b16 %v324, %v316
    %v421 = vpack.c.b16 %v325, %v317
    %v422 = vpack.c.b16 %v326, %v318
    %v423 = vpack.c.b16 %v327, %v319
    %v424 = vpack.c.b16 %v336, %v328
    %v425 = vpack.c.b16 %v337, %v329
    %v426 = vpack.c.b16 %v338, %v330
    %v427 = vpack.c.b16 %v339, %v331
    %v428 = vpack.c.b16 %v340, %v332
    %v429 = vpack.c.b16 %v341, %v333
    %v430 = vpack.c.b16 %v342, %v334
    %v431 = vpack.c.b16 %v343, %v335
    %v432 = vpack.c.b16 %v352, %v344
    %v433 = vpack.c.b16 %v353, %v345
    %v434 = vpack.c.b16 %v354, %v346
    %v435 = vpack.c.b16 %v355, %v347
    %v436 = vpack.c.b16 %v356, %v348
    %v437 = vpack.c.b16 %v357, %v349
    %v438 = vpack.c.b16 %v358, %v350
    %v439 = vpack.c.b16 %v359, %v351
    %v440 = vpack.c.b16 %v368, %v360
    %v441 = vpack.c.b16 %v369, %v361
    %v442 = vpack.c.b16 %v370, %v362
    %v443 = vpack.c.b16 %v371, %v363
    %v444 = vpack.c.b16 %v372, %v364
    %v445 = vpack.c.b16 %v373, %v365
    %v446 = vpack.c.b16 %v374, %v366
    %v447 = vpack.c.b16 %v375, %v367
    %v448 = vpack.c.b16 %v384, %v376
    %v449 = vpack.c.b16 %v385, %v377
    %v450 = vpack.c.b16 %v386, %v378
    %v451 = vpack.c.b16 %v387, %v379
    %v452 = vpack.c.b16 %v388, %v380
    %v453 = vpack.c.b16 %v389, %v381
    %v454 = vpack.c.b16 %v390, %v382
    %v455 = vpack.c.b16 %v391, %v383
    %520 = vmatprep.subr.bf16.mxu0 %v393
    %521 = vmatpush1.bf16.msra.mxu0 %v392
    %522 = vmatprep.subr.bf16.mxu0 %v401
    %523 = vmatpush1.bf16.msra.mxu0 %v400
    %524 = vmatprep.subr.bf16.mxu0 %v409
    %525 = vmatpush1.bf16.msra.mxu0 %v408
    %526 = vmatprep.subr.bf16.mxu0 %v417
    %527 = vmatpush1.bf16.msra.mxu0 %v416
    %528 = vmatprep.subr.bf16.mxu0 %v425
    %529 = vmatpush1.bf16.msra.mxu0 %v424
    %530 = vmatprep.subr.bf16.mxu0 %v433
    %531 = vmatpush1.bf16.msra.mxu0 %v432
    %532 = vmatprep.subr.bf16.mxu0 %v441
    %533 = vmatpush1.bf16.msra.mxu0 %v440
    %534 = vmatprep.subr.bf16.mxu0 %v449
    %535 = vmatpush1.bf16.msra.mxu0 %v448
    %536 = vmatprep.subr.bf16.mxu0 0
    %537 = vmatpush1.bf16.msra.mxu0 0
    %538 = vmatprep.subr.bf16.mxu0 0
    %539 = vmatpush1.bf16.msra.mxu0 0
    %540 = vmatprep.subr.bf16.mxu0 0
    %541 = vmatpush1.bf16.msra.mxu0 0
    %542 = vmatprep.subr.bf16.mxu0 0
    %543 = vmatpush1.bf16.msra.mxu0 0
    %544 = vmatprep.subr.bf16.mxu0 0
    %545 = vmatpush1.bf16.msra.mxu0 0
    %546 = vmatprep.subr.bf16.mxu0 0
    %547 = vmatpush1.bf16.msra.mxu0 0
    %548 = vmatprep.subr.bf16.mxu0 0
    %549 = vmatpush1.bf16.msra.mxu0 0
    %550 = vmatprep.subr.bf16.mxu0 0
    %551 = vmatpush1.bf16.msra.mxu0 0
    %552 = vmatprep.mubr.bf16.mxu0 0
    %553 = vmatmul.mubr.bf16.gmra.mrb[0].mxu0 %v93
    %v554 = vpop.f32.mrb[0].mxu0
    %v555 = vadd.f32 %v163, %v554
    %v556 = vpop.f32.mrb[0].mxu0
    %v557 = vadd.f32 %v167, %v556
    %v558 = vpop.f32.mrb[0].mxu0
    %v559 = vpop.f32.mrb[0].mxu0
    %560 = vdwg.mxu0
    %561 = vmatprep.subr.bf16.mxu0 %v395
    %562 = vmatpush1.bf16.msra.mxu0 %v394
    %563 = vmatprep.subr.bf16.mxu0 %v403
    %564 = vmatpush1.bf16.msra.mxu0 %v402
    %565 = vmatprep.subr.bf16.mxu0 %v411
    %566 = vmatpush1.bf16.msra.mxu0 %v410
    %567 = vmatprep.subr.bf16.mxu0 %v419
    %568 = vmatpush1.bf16.msra.mxu0 %v418
    %569 = vmatprep.subr.bf16.mxu0 %v427
    %570 = vmatpush1.bf16.msra.mxu0 %v426
    %571 = vmatprep.subr.bf16.mxu0 %v435
    %572 = vmatpush1.bf16.msra.mxu0 %v434
    %573 = vmatprep.subr.bf16.mxu0 %v443
    %574 = vmatpush1.bf16.msra.mxu0 %v442
    %575 = vmatprep.subr.bf16.mxu0 %v451
    %576 = vmatpush1.bf16.msra.mxu0 %v450
    %577 = vmatprep.subr.bf16.mxu0 0
    %578 = vmatpush1.bf16.msra.mxu0 0
    %579 = vmatprep.subr.bf16.mxu0 0
    %580 = vmatpush1.bf16.msra.mxu0 0
    %581 = vmatprep.subr.bf16.mxu0 0
    %582 = vmatpush1.bf16.msra.mxu0 0
    %583 = vmatprep.subr.bf16.mxu0 0
    %584 = vmatpush1.bf16.msra.mxu0 0
    %585 = vmatprep.subr.bf16.mxu0 0
    %586 = vmatpush1.bf16.msra.mxu0 0
    %587 = vmatprep.subr.bf16.mxu0 0
    %588 = vmatpush1.bf16.msra.mxu0 0
    %589 = vmatprep.subr.bf16.mxu0 0
    %590 = vmatpush1.bf16.msra.mxu0 0
    %591 = vmatprep.subr.bf16.mxu0 0
    %592 = vmatpush1.bf16.msra.mxu0 0
    %593 = vmatprep.mubr.bf16.mxu0 0
    %594 = vmatmul.mubr.bf16.gmra.mrb[0].mxu0 %v93
    %v595 = vpop.f32.mrb[0].mxu0
    %v596 = vadd.f32 %v171, %v595
    %v597 = vpop.f32.mrb[0].mxu0
    %v598 = vadd.f32 %v175, %v597
    %v599 = vpop.f32.mrb[0].mxu0
    %v600 = vpop.f32.mrb[0].mxu0
    %601 = vdwg.mxu0
    %602 = vmatprep.subr.bf16.mxu0 %v397
    %603 = vmatpush1.bf16.msra.mxu0 %v396
    %604 = vmatprep.subr.bf16.mxu0 %v405
    %605 = vmatpush1.bf16.msra.mxu0 %v404
    %606 = vmatprep.subr.bf16.mxu0 %v413
    %607 = vmatpush1.bf16.msra.mxu0 %v412
    %608 = vmatprep.subr.bf16.mxu0 %v421
    %609 = vmatpush1.bf16.msra.mxu0 %v420
    %610 = vmatprep.subr.bf16.mxu0 %v429
    %611 = vmatpush1.bf16.msra.mxu0 %v428
    %612 = vmatprep.subr.bf16.mxu0 %v437
    %613 = vmatpush1.bf16.msra.mxu0 %v436
    %614 = vmatprep.subr.bf16.mxu0 %v445
    %615 = vmatpush1.bf16.msra.mxu0 %v444
    %616 = vmatprep.subr.bf16.mxu0 %v453
    %617 = vmatpush1.bf16.msra.mxu0 %v452
    %618 = vmatprep.subr.bf16.mxu0 0
    %619 = vmatpush1.bf16.msra.mxu0 0
    %620 = vmatprep.subr.bf16.mxu0 0
    %621 = vmatpush1.bf16.msra.mxu0 0
    %622 = vmatprep.subr.bf16.mxu0 0
    %623 = vmatpush1.bf16.msra.mxu0 0
    %624 = vmatprep.subr.bf16.mxu0 0
    %625 = vmatpush1.bf16.msra.mxu0 0
    %626 = vmatprep.subr.bf16.mxu0 0
    %627 = vmatpush1.bf16.msra.mxu0 0
    %628 = vmatprep.subr.bf16.mxu0 0
    %629 = vmatpush1.bf16.msra.mxu0 0
    %630 = vmatprep.subr.bf16.mxu0 0
    %631 = vmatpush1.bf16.msra.mxu0 0
    %632 = vmatprep.subr.bf16.mxu0 0
    %633 = vmatpush1.bf16.msra.mxu0 0
    %634 = vmatprep.mubr.bf16.mxu0 0
    %635 = vmatmul.mubr.bf16.gmra.mrb[0].mxu0 %v93
    %v636 = vpop.f32.mrb[0].mxu0
    %v637 = vadd.f32 %v179, %v636
    %v638 = vpop.f32.mrb[0].mxu0
    %v639 = vadd.f32 %v183, %v638
    %v640 = vpop.f32.mrb[0].mxu0
    %v641 = vpop.f32.mrb[0].mxu0
    %642 = vdwg.mxu0
    %643 = vmatprep.subr.bf16.mxu0 %v399
    %644 = vmatpush1.bf16.msra.mxu0 %v398
    %645 = vmatprep.subr.bf16.mxu0 %v407
    %646 = vmatpush1.bf16.msra.mxu0 %v406
    %647 = vmatprep.subr.bf16.mxu0 %v415
    %648 = vmatpush1.bf16.msra.mxu0 %v414
    %649 = vmatprep.subr.bf16.mxu0 %v423
    %650 = vmatpush1.bf16.msra.mxu0 %v422
    %651 = vmatprep.subr.bf16.mxu0 %v431
    %652 = vmatpush1.bf16.msra.mxu0 %v430
    %653 = vmatprep.subr.bf16.mxu0 %v439
    %654 = vmatpush1.bf16.msra.mxu0 %v438
    %655 = vmatprep.subr.bf16.mxu0 %v447
    %656 = vmatpush1.bf16.msra.mxu0 %v446
    %657 = vmatprep.subr.bf16.mxu0 %v455
    %658 = vmatpush1.bf16.msra.mxu0 %v454
    %659 = vmatprep.subr.bf16.mxu0 0
    %660 = vmatpush1.bf16.msra.mxu0 0
    %661 = vmatprep.subr.bf16.mxu0 0
    %662 = vmatpush1.bf16.msra.mxu0 0
    %663 = vmatprep.subr.bf16.mxu0 0
    %664 = vmatpush1.bf16.msra.mxu0 0
    %665 = vmatprep.subr.bf16.mxu0 0
    %666 = vmatpush1.bf16.msra.mxu0 0
    %667 = vmatprep.subr.bf16.mxu0 0
    %668 = vmatpush1.bf16.msra.mxu0 0
    %669 = vmatprep.subr.bf16.mxu0 0
    %670 = vmatpush1.bf16.msra.mxu0 0
    %671 = vmatprep.subr.bf16.mxu0 0
    %672 = vmatpush1.bf16.msra.mxu0 0
    %673 = vmatprep.subr.bf16.mxu0 0
    %674 = vmatpush1.bf16.msra.mxu0 0
    %675 = vmatprep.mubr.bf16.mxu0 0
    %676 = vmatmul.mubr.bf16.gmra.mrb[0].mxu0 %v93
    %v677 = vpop.f32.mrb[0].mxu0
    %v678 = vadd.f32 %v187, %v677
    %v679 = vpop.f32.mrb[0].mxu0
    %v680 = vadd.f32 %v191, %v679
    %v681 = vpop.f32.mrb[0].mxu0
    %v682 = vpop.f32.mrb[0].mxu0
    %683 = vdwg.mxu0
    %v684 = vmul.f32 %v555, 0.5
    %v685 = vmul.f32 %v557, 0.5
    %v686 = vmul.f32 %v596, 0.5
    %v687 = vmul.f32 %v598, 0.5
    %v688 = vmul.f32 %v637, 0.5
    %v689 = vmul.f32 %v639, 0.5
    %v690 = vmul.f32 %v678, 0.5
    %v691 = vmul.f32 %v680, 0.5
    %v692 = vmul.f32 %v555, 0.70710677
    %v693 = vmul.f32 %v557, 0.70710677
    %v694 = vmul.f32 %v596, 0.70710677
    %v695 = vmul.f32 %v598, 0.70710677
    %v696 = vmul.f32 %v637, 0.70710677
    %v697 = vmul.f32 %v639, 0.70710677
    %v698 = vmul.f32 %v678, 0.70710677
    %v699 = vmul.f32 %v680, 0.70710677
    %v700 = verf.f32.pop %v692
    %v701 = verf.f32.pop %v693
    %v702 = verf.f32.pop %v694
    %v703 = verf.f32.pop %v695
    %v704 = verf.f32.pop %v696
    %v705 = verf.f32.pop %v697
    %v706 = verf.f32.pop %v698
    %v707 = verf.f32.pop %v699
    %v708 = vadd.f32 %v700, 1.0
    %v709 = vadd.f32 %v701, 1.0
    %v710 = vadd.f32 %v702, 1.0
    %v711 = vadd.f32 %v703, 1.0
    %v712 = vadd.f32 %v704, 1.0
    %v713 = vadd.f32 %v705, 1.0
    %v714 = vadd.f32 %v706, 1.0
    %v715 = vadd.f32 %v707, 1.0
    %v716 = vmul.f32 %v684, %v708
    %v717 = vmul.f32 %v685, %v709
    %v718 = vmul.f32 %v686, %v710
    %v719 = vmul.f32 %v687, %v711
    %v720 = vmul.f32 %v688, %v712
    %v721 = vmul.f32 %v689, %v713
    %v722 = vmul.f32 %v690, %v714
    %v723 = vmul.f32 %v691, %v715
    %v724 = vpack.c.bf16 %v716, %v716
    %v725 = vpack.c.bf16 %v717, %v717
    %v726 = vpack.c.bf16 %v718, %v718
    %v727 = vpack.c.bf16 %v719, %v719
    %v728 = vpack.c.bf16 %v720, %v720
    %v729 = vpack.c.bf16 %v721, %v721
    %v730 = vpack.c.bf16 %v722, %v722
    %v731 = vpack.c.bf16 %v723, %v723
    %v732 = vld [vmem:[#allocation8] sm:$0xf]
    %v733 = vld [vmem:[#allocation8 + $0x4] sm:$0xf]
    %v734 = vld [vmem:[#allocation8 + $0x8] sm:$0xf]
    %v735 = vld [vmem:[#allocation8 + $0xc] sm:$0xf]
    %v736 = vld [vmem:[#allocation8 + $0x10] sm:$0xf]
    %v737 = vld [vmem:[#allocation8 + $0x14] sm:$0xf]
    %v738 = vld [vmem:[#allocation8 + $0x18] sm:$0xf]
    %v739 = vld [vmem:[#allocation8 + $0x1c] sm:$0xf]
    %v740 = vld [vmem:[#allocation8 + $0x20] sm:$0xf]
    %v741 = vld [vmem:[#allocation8 + $0x24] sm:$0xf]
    %v742 = vld [vmem:[#allocation8 + $0x28] sm:$0xf]
    %v743 = vld [vmem:[#allocation8 + $0x2c] sm:$0xf]
    %v744 = vld [vmem:[#allocation8 + $0x30] sm:$0xf]
    %v745 = vld [vmem:[#allocation8 + $0x34] sm:$0xf]
    %v746 = vld [vmem:[#allocation8 + $0x38] sm:$0xf]
    %v747 = vld [vmem:[#allocation8 + $0x3c] sm:$0xf]
    %v748 = vld [vmem:[#allocation8 + $0x40] sm:$0xf]
    %v749 = vld [vmem:[#allocation8 + $0x44] sm:$0xf]
    %v750 = vld [vmem:[#allocation8 + $0x48] sm:$0xf]
    %v751 = vld [vmem:[#allocation8 + $0x4c] sm:$0xf]
    %v752 = vld [vmem:[#allocation8 + $0x50] sm:$0xf]
    %v753 = vld [vmem:[#allocation8 + $0x54] sm:$0xf]
    %v754 = vld [vmem:[#allocation8 + $0x58] sm:$0xf]
    %v755 = vld [vmem:[#allocation8 + $0x5c] sm:$0xf]
    %v756 = vld [vmem:[#allocation8 + $0x60] sm:$0xf]
    %v757 = vld [vmem:[#allocation8 + $0x64] sm:$0xf]
    %v758 = vld [vmem:[#allocation8 + $0x68] sm:$0xf]
    %v759 = vld [vmem:[#allocation8 + $0x6c] sm:$0xf]
    %v760 = vld [vmem:[#allocation8 + $0x70] sm:$0xf]
    %v761 = vld [vmem:[#allocation8 + $0x74] sm:$0xf]
    %v762 = vld [vmem:[#allocation8 + $0x78] sm:$0xf]
    %v763 = vld [vmem:[#allocation8 + $0x7c] sm:$0xf]
    %v764 = vld [vmem:[#allocation8 + $0x80] sm:$0xf]
    %v765 = vld [vmem:[#allocation8 + $0x84] sm:$0xf]
    %v766 = vld [vmem:[#allocation8 + $0x88] sm:$0xf]
    %v767 = vld [vmem:[#allocation8 + $0x8c] sm:$0xf]
    %v768 = vld [vmem:[#allocation8 + $0x90] sm:$0xf]
    %v769 = vld [vmem:[#allocation8 + $0x94] sm:$0xf]
    %v770 = vld [vmem:[#allocation8 + $0x98] sm:$0xf]
    %v771 = vld [vmem:[#allocation8 + $0x9c] sm:$0xf]
    %v772 = vld [vmem:[#allocation8 + $0xa0] sm:$0xf]
    %v773 = vld [vmem:[#allocation8 + $0xa4] sm:$0xf]
    %v774 = vld [vmem:[#allocation8 + $0xa8] sm:$0xf]
    %v775 = vld [vmem:[#allocation8 + $0xac] sm:$0xf]
    %v776 = vld [vmem:[#allocation8 + $0xb0] sm:$0xf]
    %v777 = vld [vmem:[#allocation8 + $0xb4] sm:$0xf]
    %v778 = vld [vmem:[#allocation8 + $0xb8] sm:$0xf]
    %v779 = vld [vmem:[#allocation8 + $0xbc] sm:$0xf]
    %v780 = vld [vmem:[#allocation8 + $0xc0] sm:$0xf]
    %v781 = vld [vmem:[#allocation8 + $0xc4] sm:$0xf]
    %v782 = vld [vmem:[#allocation8 + $0xc8] sm:$0xf]
    %v783 = vld [vmem:[#allocation8 + $0xcc] sm:$0xf]
    %v784 = vld [vmem:[#allocation8 + $0xd0] sm:$0xf]
    %v785 = vld [vmem:[#allocation8 + $0xd4] sm:$0xf]
    %v786 = vld [vmem:[#allocation8 + $0xd8] sm:$0xf]
    %v787 = vld [vmem:[#allocation8 + $0xdc] sm:$0xf]
    %v788 = vld [vmem:[#allocation8 + $0xe0] sm:$0xf]
    %v789 = vld [vmem:[#allocation8 + $0xe4] sm:$0xf]
    %v790 = vld [vmem:[#allocation8 + $0xe8] sm:$0xf]
    %v791 = vld [vmem:[#allocation8 + $0xec] sm:$0xf]
    %v792 = vld [vmem:[#allocation8 + $0xf0] sm:$0xf]
    %v793 = vld [vmem:[#allocation8 + $0xf4] sm:$0xf]
    %v794 = vld [vmem:[#allocation8 + $0xf8] sm:$0xf]
    %v795 = vld [vmem:[#allocation8 + $0xfc] sm:$0xf]
    %v796 = vld [vmem:[#allocation8 + $0x100] sm:$0xf]
    %v797 = vld [vmem:[#allocation8 + $0x104] sm:$0xf]
    %v798 = vld [vmem:[#allocation8 + $0x108] sm:$0xf]
    %v799 = vld [vmem:[#allocation8 + $0x10c] sm:$0xf]
    %v800 = vld [vmem:[#allocation8 + $0x110] sm:$0xf]
    %v801 = vld [vmem:[#allocation8 + $0x114] sm:$0xf]
    %v802 = vld [vmem:[#allocation8 + $0x118] sm:$0xf]
    %v803 = vld [vmem:[#allocation8 + $0x11c] sm:$0xf]
    %v804 = vld [vmem:[#allocation8 + $0x120] sm:$0xf]
    %v805 = vld [vmem:[#allocation8 + $0x124] sm:$0xf]
    %v806 = vld [vmem:[#allocation8 + $0x128] sm:$0xf]
    %v807 = vld [vmem:[#allocation8 + $0x12c] sm:$0xf]
    %v808 = vld [vmem:[#allocation8 + $0x130] sm:$0xf]
    %v809 = vld [vmem:[#allocation8 + $0x134] sm:$0xf]
    %v810 = vld [vmem:[#allocation8 + $0x138] sm:$0xf]
    %v811 = vld [vmem:[#allocation8 + $0x13c] sm:$0xf]
    %v812 = vld [vmem:[#allocation8 + $0x140] sm:$0xf]
    %v813 = vld [vmem:[#allocation8 + $0x144] sm:$0xf]
    %v814 = vld [vmem:[#allocation8 + $0x148] sm:$0xf]
    %v815 = vld [vmem:[#allocation8 + $0x14c] sm:$0xf]
    %v816 = vld [vmem:[#allocation8 + $0x150] sm:$0xf]
    %v817 = vld [vmem:[#allocation8 + $0x154] sm:$0xf]
    %v818 = vld [vmem:[#allocation8 + $0x158] sm:$0xf]
    %v819 = vld [vmem:[#allocation8 + $0x15c] sm:$0xf]
    %v820 = vld [vmem:[#allocation8 + $0x160] sm:$0xf]
    %v821 = vld [vmem:[#allocation8 + $0x164] sm:$0xf]
    %v822 = vld [vmem:[#allocation8 + $0x168] sm:$0xf]
    %v823 = vld [vmem:[#allocation8 + $0x16c] sm:$0xf]
    %v824 = vld [vmem:[#allocation8 + $0x170] sm:$0xf]
    %v825 = vld [vmem:[#allocation8 + $0x174] sm:$0xf]
    %v826 = vld [vmem:[#allocation8 + $0x178] sm:$0xf]
    %v827 = vld [vmem:[#allocation8 + $0x17c] sm:$0xf]
    %v828 = vld [vmem:[#allocation8 + $0x180] sm:$0xf]
    %v829 = vld [vmem:[#allocation8 + $0x184] sm:$0xf]
    %v830 = vld [vmem:[#allocation8 + $0x188] sm:$0xf]
    %v831 = vld [vmem:[#allocation8 + $0x18c] sm:$0xf]
    %v832 = vld [vmem:[#allocation8 + $0x190] sm:$0xf]
    %v833 = vld [vmem:[#allocation8 + $0x194] sm:$0xf]
    %v834 = vld [vmem:[#allocation8 + $0x198] sm:$0xf]
    %v835 = vld [vmem:[#allocation8 + $0x19c] sm:$0xf]
    %v836 = vld [vmem:[#allocation8 + $0x1a0] sm:$0xf]
    %v837 = vld [vmem:[#allocation8 + $0x1a4] sm:$0xf]
    %v838 = vld [vmem:[#allocation8 + $0x1a8] sm:$0xf]
    %v839 = vld [vmem:[#allocation8 + $0x1ac] sm:$0xf]
    %v840 = vld [vmem:[#allocation8 + $0x1b0] sm:$0xf]
    %v841 = vld [vmem:[#allocation8 + $0x1b4] sm:$0xf]
    %v842 = vld [vmem:[#allocation8 + $0x1b8] sm:$0xf]
    %v843 = vld [vmem:[#allocation8 + $0x1bc] sm:$0xf]
    %v844 = vld [vmem:[#allocation8 + $0x1c0] sm:$0xf]
    %v845 = vld [vmem:[#allocation8 + $0x1c4] sm:$0xf]
    %v846 = vld [vmem:[#allocation8 + $0x1c8] sm:$0xf]
    %v847 = vld [vmem:[#allocation8 + $0x1cc] sm:$0xf]
    %v848 = vld [vmem:[#allocation8 + $0x1d0] sm:$0xf]
    %v849 = vld [vmem:[#allocation8 + $0x1d4] sm:$0xf]
    %v850 = vld [vmem:[#allocation8 + $0x1d8] sm:$0xf]
    %v851 = vld [vmem:[#allocation8 + $0x1dc] sm:$0xf]
    %v852 = vld [vmem:[#allocation8 + $0x1e0] sm:$0xf]
    %v853 = vld [vmem:[#allocation8 + $0x1e4] sm:$0xf]
    %v854 = vld [vmem:[#allocation8 + $0x1e8] sm:$0xf]
    %v855 = vld [vmem:[#allocation8 + $0x1ec] sm:$0xf]
    %v856 = vld [vmem:[#allocation8 + $0x1f0] sm:$0xf]
    %v857 = vld [vmem:[#allocation8 + $0x1f4] sm:$0xf]
    %v858 = vld [vmem:[#allocation8 + $0x1f8] sm:$0xf]
    %v859 = vld [vmem:[#allocation8 + $0x1fc] sm:$0xf]
    %v860 = vld [vmem:[%s4] sm:$0x1]
    %v862 = vlaneseq
    %v863 = vshrl.u32 %v862, 7
    %v864 = vsub.s32 0, %v863
    %v865 = vrot.slane %v860, %v864
    %v995 = vunpack.c.l.b16 %v732
    %v996 = vunpack.c.l.b16 %v733
    %v997 = vunpack.c.l.b16 %v734
    %v998 = vunpack.c.l.b16 %v735
    %v999 = vunpack.c.l.b16 %v736
    %v1000 = vunpack.c.l.b16 %v737
    %v1001 = vunpack.c.l.b16 %v738
    %v1002 = vunpack.c.l.b16 %v739
    %v1003 = vunpack.c.l.b16 %v740
    %v1004 = vunpack.c.l.b16 %v741
    %v1005 = vunpack.c.l.b16 %v742
    %v1006 = vunpack.c.l.b16 %v743
    %v1007 = vunpack.c.l.b16 %v744
    %v1008 = vunpack.c.l.b16 %v745
    %v1009 = vunpack.c.l.b16 %v746
    %v1010 = vunpack.c.l.b16 %v747
    %v1011 = vunpack.c.l.b16 %v748
    %v1012 = vunpack.c.l.b16 %v749
    %v1013 = vunpack.c.l.b16 %v750
    %v1014 = vunpack.c.l.b16 %v751
    %v1015 = vunpack.c.l.b16 %v752
    %v1016 = vunpack.c.l.b16 %v753
    %v1017 = vunpack.c.l.b16 %v754
    %v1018 = vunpack.c.l.b16 %v755
    %v1019 = vunpack.c.l.b16 %v756
    %v1020 = vunpack.c.l.b16 %v757
    %v1021 = vunpack.c.l.b16 %v758
    %v1022 = vunpack.c.l.b16 %v759
    %v1023 = vunpack.c.l.b16 %v760
    %v1024 = vunpack.c.l.b16 %v761
    %v1025 = vunpack.c.l.b16 %v762
    %v1026 = vunpack.c.l.b16 %v763
    %v1027 = vunpack.c.l.b16 %v764
    %v1028 = vunpack.c.l.b16 %v765
    %v1029 = vunpack.c.l.b16 %v766
    %v1030 = vunpack.c.l.b16 %v767
    %v1031 = vunpack.c.l.b16 %v768
    %v1032 = vunpack.c.l.b16 %v769
    %v1033 = vunpack.c.l.b16 %v770
    %v1034 = vunpack.c.l.b16 %v771
    %v1035 = vunpack.c.l.b16 %v772
    %v1036 = vunpack.c.l.b16 %v773
    %v1037 = vunpack.c.l.b16 %v774
    %v1038 = vunpack.c.l.b16 %v775
    %v1039 = vunpack.c.l.b16 %v776
    %v1040 = vunpack.c.l.b16 %v777
    %v1041 = vunpack.c.l.b16 %v778
    %v1042 = vunpack.c.l.b16 %v779
    %v1043 = vunpack.c.l.b16 %v780
    %v1044 = vunpack.c.l.b16 %v781
    %v1045 = vunpack.c.l.b16 %v782
    %v1046 = vunpack.c.l.b16 %v783
    %v1047 = vunpack.c.l.b16 %v784
    %v1048 = vunpack.c.l.b16 %v785
    %v1049 = vunpack.c.l.b16 %v786
    %v1050 = vunpack.c.l.b16 %v787
    %v1051 = vunpack.c.l.b16 %v788
    %v1052 = vunpack.c.l.b16 %v789
    %v1053 = vunpack.c.l.b16 %v790
    %v1054 = vunpack.c.l.b16 %v791
    %v1055 = vunpack.c.l.b16 %v792
    %v1056 = vunpack.c.l.b16 %v793
    %v1057 = vunpack.c.l.b16 %v794
    %v1058 = vunpack.c.l.b16 %v795
    %v1059 = vunpack.c.l.b16 %v796
    %v1060 = vunpack.c.l.b16 %v797
    %v1061 = vunpack.c.l.b16 %v798
    %v1062 = vunpack.c.l.b16 %v799
    %v1063 = vunpack.c.l.b16 %v800
    %v1064 = vunpack.c.l.b16 %v801
    %v1065 = vunpack.c.l.b16 %v802
    %v1066 = vunpack.c.l.b16 %v803
    %v1067 = vunpack.c.l.b16 %v804
    %v1068 = vunpack.c.l.b16 %v805
    %v1069 = vunpack.c.l.b16 %v806
    %v1070 = vunpack.c.l.b16 %v807
    %v1071 = vunpack.c.l.b16 %v808
    %v1072 = vunpack.c.l.b16 %v809
    %v1073 = vunpack.c.l.b16 %v810
    %v1074 = vunpack.c.l.b16 %v811
    %v1075 = vunpack.c.l.b16 %v812
    %v1076 = vunpack.c.l.b16 %v813
    %v1077 = vunpack.c.l.b16 %v814
    %v1078 = vunpack.c.l.b16 %v815
    %v1079 = vunpack.c.l.b16 %v816
    %v1080 = vunpack.c.l.b16 %v817
    %v1081 = vunpack.c.l.b16 %v818
    %v1082 = vunpack.c.l.b16 %v819
    %v1083 = vunpack.c.l.b16 %v820
    %v1084 = vunpack.c.l.b16 %v821
    %v1085 = vunpack.c.l.b16 %v822
    %v1086 = vunpack.c.l.b16 %v823
    %v1087 = vunpack.c.l.b16 %v824
    %v1088 = vunpack.c.l.b16 %v825
    %v1089 = vunpack.c.l.b16 %v826
    %v1090 = vunpack.c.l.b16 %v827
    %v1091 = vunpack.c.l.b16 %v828
    %v1092 = vunpack.c.l.b16 %v829
    %v1093 = vunpack.c.l.b16 %v830
    %v1094 = vunpack.c.l.b16 %v831
    %v1095 = vunpack.c.l.b16 %v832
    %v1096 = vunpack.c.l.b16 %v833
    %v1097 = vunpack.c.l.b16 %v834
    %v1098 = vunpack.c.l.b16 %v835
    %v1099 = vunpack.c.l.b16 %v836
    %v1100 = vunpack.c.l.b16 %v837
    %v1101 = vunpack.c.l.b16 %v838
    %v1102 = vunpack.c.l.b16 %v839
    %v1103 = vunpack.c.l.b16 %v840
    %v1104 = vunpack.c.l.b16 %v841
    %v1105 = vunpack.c.l.b16 %v842
    %v1106 = vunpack.c.l.b16 %v843
    %v1107 = vunpack.c.l.b16 %v844
    %v1108 = vunpack.c.l.b16 %v845
    %v1109 = vunpack.c.l.b16 %v846
    %v1110 = vunpack.c.l.b16 %v847
    %v1111 = vunpack.c.l.b16 %v848
    %v1112 = vunpack.c.l.b16 %v849
    %v1113 = vunpack.c.l.b16 %v850
    %v1114 = vunpack.c.l.b16 %v851
    %v1115 = vunpack.c.l.b16 %v852
    %v1116 = vunpack.c.l.b16 %v853
    %v1117 = vunpack.c.l.b16 %v854
    %v1118 = vunpack.c.l.b16 %v855
    %v1119 = vunpack.c.l.b16 %v856
    %v1120 = vunpack.c.l.b16 %v857
    %v1121 = vunpack.c.l.b16 %v858
    %v1122 = vunpack.c.l.b16 %v859
    %v1123 = vpack.c.b16 %v996, %v995
    %v1124 = vpack.c.b16 %v998, %v997
    %v1125 = vpack.c.b16 %v1000, %v999
    %v1126 = vpack.c.b16 %v1002, %v1001
    %v1127 = vpack.c.b16 %v1004, %v1003
    %v1128 = vpack.c.b16 %v1006, %v1005
    %v1129 = vpack.c.b16 %v1008, %v1007
    %v1130 = vpack.c.b16 %v1010, %v1009
    %v1131 = vpack.c.b16 %v1012, %v1011
    %v1132 = vpack.c.b16 %v1014, %v1013
    %v1133 = vpack.c.b16 %v1016, %v1015
    %v1134 = vpack.c.b16 %v1018, %v1017
    %v1135 = vpack.c.b16 %v1020, %v1019
    %v1136 = vpack.c.b16 %v1022, %v1021
    %v1137 = vpack.c.b16 %v1024, %v1023
    %v1138 = vpack.c.b16 %v1026, %v1025
    %v1139 = vpack.c.b16 %v1028, %v1027
    %v1140 = vpack.c.b16 %v1030, %v1029
    %v1141 = vpack.c.b16 %v1032, %v1031
    %v1142 = vpack.c.b16 %v1034, %v1033
    %v1143 = vpack.c.b16 %v1036, %v1035
    %v1144 = vpack.c.b16 %v1038, %v1037
    %v1145 = vpack.c.b16 %v1040, %v1039
    %v1146 = vpack.c.b16 %v1042, %v1041
    %v1147 = vpack.c.b16 %v1044, %v1043
    %v1148 = vpack.c.b16 %v1046, %v1045
    %v1149 = vpack.c.b16 %v1048, %v1047
    %v1150 = vpack.c.b16 %v1050, %v1049
    %v1151 = vpack.c.b16 %v1052, %v1051
    %v1152 = vpack.c.b16 %v1054, %v1053
    %v1153 = vpack.c.b16 %v1056, %v1055
    %v1154 = vpack.c.b16 %v1058, %v1057
    %v1155 = vpack.c.b16 %v1060, %v1059
    %v1156 = vpack.c.b16 %v1062, %v1061
    %v1157 = vpack.c.b16 %v1064, %v1063
    %v1158 = vpack.c.b16 %v1066, %v1065
    %v1159 = vpack.c.b16 %v1068, %v1067
    %v1160 = vpack.c.b16 %v1070, %v1069
    %v1161 = vpack.c.b16 %v1072, %v1071
    %v1162 = vpack.c.b16 %v1074, %v1073
    %v1163 = vpack.c.b16 %v1076, %v1075
    %v1164 = vpack.c.b16 %v1078, %v1077
    %v1165 = vpack.c.b16 %v1080, %v1079
    %v1166 = vpack.c.b16 %v1082, %v1081
    %v1167 = vpack.c.b16 %v1084, %v1083
    %v1168 = vpack.c.b16 %v1086, %v1085
    %v1169 = vpack.c.b16 %v1088, %v1087
    %v1170 = vpack.c.b16 %v1090, %v1089
    %v1171 = vpack.c.b16 %v1092, %v1091
    %v1172 = vpack.c.b16 %v1094, %v1093
    %v1173 = vpack.c.b16 %v1096, %v1095
    %v1174 = vpack.c.b16 %v1098, %v1097
    %v1175 = vpack.c.b16 %v1100, %v1099
    %v1176 = vpack.c.b16 %v1102, %v1101
    %v1177 = vpack.c.b16 %v1104, %v1103
    %v1178 = vpack.c.b16 %v1106, %v1105
    %v1179 = vpack.c.b16 %v1108, %v1107
    %v1180 = vpack.c.b16 %v1110, %v1109
    %v1181 = vpack.c.b16 %v1112, %v1111
    %v1182 = vpack.c.b16 %v1114, %v1113
    %v1183 = vpack.c.b16 %v1116, %v1115
    %v1184 = vpack.c.b16 %v1118, %v1117
    %v1185 = vpack.c.b16 %v1120, %v1119
    %v1186 = vpack.c.b16 %v1122, %v1121
    %1251 = vmatprep.subr.bf16.mxu0 0
    %1252 = vmatpush1.bf16.msra.mxu0 %v1123
    %1253 = vmatprep.subr.bf16.mxu0 0
    %1254 = vmatpush1.bf16.msra.mxu0 %v1124
    %1255 = vmatprep.subr.bf16.mxu0 0
    %1256 = vmatpush1.bf16.msra.mxu0 %v1125
    %1257 = vmatprep.subr.bf16.mxu0 0
    %1258 = vmatpush1.bf16.msra.mxu0 %v1126
    %1259 = vmatprep.subr.bf16.mxu0 0
    %1260 = vmatpush1.bf16.msra.mxu0 %v1127
    %1261 = vmatprep.subr.bf16.mxu0 0
    %1262 = vmatpush1.bf16.msra.mxu0 %v1128
    %1263 = vmatprep.subr.bf16.mxu0 0
    %1264 = vmatpush1.bf16.msra.mxu0 %v1129
    %1265 = vmatprep.subr.bf16.mxu0 0
    %1266 = vmatpush1.bf16.msra.mxu0 %v1130
    %1267 = vmatprep.subr.bf16.mxu0 0
    %1268 = vmatpush1.bf16.msra.mxu0 %v1131
    %1269 = vmatprep.subr.bf16.mxu0 0
    %1270 = vmatpush1.bf16.msra.mxu0 %v1132
    %1271 = vmatprep.subr.bf16.mxu0 0
    %1272 = vmatpush1.bf16.msra.mxu0 %v1133
    %1273 = vmatprep.subr.bf16.mxu0 0
    %1274 = vmatpush1.bf16.msra.mxu0 %v1134
    %1275 = vmatprep.subr.bf16.mxu0 0
    %1276 = vmatpush1.bf16.msra.mxu0 %v1135
    %1277 = vmatprep.subr.bf16.mxu0 0
    %1278 = vmatpush1.bf16.msra.mxu0 %v1136
    %1279 = vmatprep.subr.bf16.mxu0 0
    %1280 = vmatpush1.bf16.msra.mxu0 %v1137
    %1281 = vmatprep.subr.bf16.mxu0 0
    %1282 = vmatpush1.bf16.msra.mxu0 %v1138
    %1283 = vmatprep.mubr.bf16.mxu0 %v725
    %1284 = vmatmul.mubr.bf16.gmra.mrb[0].mxu0 %v724
    %v1285 = vpop.f32.mrb[0].mxu0
    %v1286 = vadd.f32 %v865, %v1285
    %v1287 = vpop.f32.mrb[0].mxu0
    %v1288 = vpop.f32.mrb[0].mxu0
    %v1289 = vpop.f32.mrb[0].mxu0
    %1290 = vdwg.mxu0
    %1291 = vmatprep.subr.bf16.mxu0 0
    %1292 = vmatpush1.bf16.msra.mxu0 %v1139
    %1293 = vmatprep.subr.bf16.mxu0 0
    %1294 = vmatpush1.bf16.msra.mxu0 %v1140
    %1295 = vmatprep.subr.bf16.mxu0 0
    %1296 = vmatpush1.bf16.msra.mxu0 %v1141
    %1297 = vmatprep.subr.bf16.mxu0 0
    %1298 = vmatpush1.bf16.msra.mxu0 %v1142
    %1299 = vmatprep.subr.bf16.mxu0 0
    %1300 = vmatpush1.bf16.msra.mxu0 %v1143
    %1301 = vmatprep.subr.bf16.mxu0 0
    %1302 = vmatpush1.bf16.msra.mxu0 %v1144
    %1303 = vmatprep.subr.bf16.mxu0 0
    %1304 = vmatpush1.bf16.msra.mxu0 %v1145
    %1305 = vmatprep.subr.bf16.mxu0 0
    %1306 = vmatpush1.bf16.msra.mxu0 %v1146
    %1307 = vmatprep.subr.bf16.mxu0 0
    %1308 = vmatpush1.bf16.msra.mxu0 %v1147
    %1309 = vmatprep.subr.bf16.mxu0 0
    %1310 = vmatpush1.bf16.msra.mxu0 %v1148
    %1311 = vmatprep.subr.bf16.mxu0 0
    %1312 = vmatpush1.bf16.msra.mxu0 %v1149
    %1313 = vmatprep.subr.bf16.mxu0 0
    %1314 = vmatpush1.bf16.msra.mxu0 %v1150
    %1315 = vmatprep.subr.bf16.mxu0 0
    %1316 = vmatpush1.bf16.msra.mxu0 %v1151
    %1317 = vmatprep.subr.bf16.mxu0 0
    %1318 = vmatpush1.bf16.msra.mxu0 %v1152
    %1319 = vmatprep.subr.bf16.mxu0 0
    %1320 = vmatpush1.bf16.msra.mxu0 %v1153
    %1321 = vmatprep.subr.bf16.mxu0 0
    %1322 = vmatpush1.bf16.msra.mxu0 %v1154
    %1323 = vmatprep.mubr.bf16.mxu0 %v727
    %1324 = vmatmul.mubr.bf16.gmra.mrb[0].mxu0 %v726
    %v1325 = vpop.f32.mrb[0].mxu0
    %v1326 = vadd.f32 %v1286, %v1325
    %v1327 = vpop.f32.mrb[0].mxu0
    %v1328 = vpop.f32.mrb[0].mxu0
    %v1329 = vpop.f32.mrb[0].mxu0
    %1330 = vdwg.mxu0
    %1331 = vmatprep.subr.bf16.mxu0 0
    %1332 = vmatpush1.bf16.msra.mxu0 %v1155
    %1333 = vmatprep.subr.bf16.mxu0 0
    %1334 = vmatpush1.bf16.msra.mxu0 %v1156
    %1335 = vmatprep.subr.bf16.mxu0 0
    %1336 = vmatpush1.bf16.msra.mxu0 %v1157
    %1337 = vmatprep.subr.bf16.mxu0 0
    %1338 = vmatpush1.bf16.msra.mxu0 %v1158
    %1339 = vmatprep.subr.bf16.mxu0 0
    %1340 = vmatpush1.bf16.msra.mxu0 %v1159
    %1341 = vmatprep.subr.bf16.mxu0 0
    %1342 = vmatpush1.bf16.msra.mxu0 %v1160
    %1343 = vmatprep.subr.bf16.mxu0 0
    %1344 = vmatpush1.bf16.msra.mxu0 %v1161
    %1345 = vmatprep.subr.bf16.mxu0 0
    %1346 = vmatpush1.bf16.msra.mxu0 %v1162
    %1347 = vmatprep.subr.bf16.mxu0 0
    %1348 = vmatpush1.bf16.msra.mxu0 %v1163
    %1349 = vmatprep.subr.bf16.mxu0 0
    %1350 = vmatpush1.bf16.msra.mxu0 %v1164
    %1351 = vmatprep.subr.bf16.mxu0 0
    %1352 = vmatpush1.bf16.msra.mxu0 %v1165
    %1353 = vmatprep.subr.bf16.mxu0 0
    %1354 = vmatpush1.bf16.msra.mxu0 %v1166
    %1355 = vmatprep.subr.bf16.mxu0 0
    %1356 = vmatpush1.bf16.msra.mxu0 %v1167
    %1357 = vmatprep.subr.bf16.mxu0 0
    %1358 = vmatpush1.bf16.msra.mxu0 %v1168
    %1359 = vmatprep.subr.bf16.mxu0 0
    %1360 = vmatpush1.bf16.msra.mxu0 %v1169
    %1361 = vmatprep.subr.bf16.mxu0 0
    %1362 = vmatpush1.bf16.msra.mxu0 %v1170
    %1363 = vmatprep.mubr.bf16.mxu0 %v729
    %1364 = vmatmul.mubr.bf16.gmra.mrb[0].mxu0 %v728
    %v1365 = vpop.f32.mrb[0].mxu0
    %v1366 = vadd.f32 %v1326, %v1365
    %v1367 = vpop.f32.mrb[0].mxu0
    %v1368 = vpop.f32.mrb[0].mxu0
    %v1369 = vpop.f32.mrb[0].mxu0
    %1370 = vdwg.mxu0
    %1371 = vmatprep.subr.bf16.mxu0 0
    %1372 = vmatpush1.bf16.msra.mxu0 %v1171
    %1373 = vmatprep.subr.bf16.mxu0 0
    %1374 = vmatpush1.bf16.msra.mxu0 %v1172
    %1375 = vmatprep.subr.bf16.mxu0 0
    %1376 = vmatpush1.bf16.msra.mxu0 %v1173
    %1377 = vmatprep.subr.bf16.mxu0 0
    %1378 = vmatpush1.bf16.msra.mxu0 %v1174
    %1379 = vmatprep.subr.bf16.mxu0 0
    %1380 = vmatpush1.bf16.msra.mxu0 %v1175
    %1381 = vmatprep.subr.bf16.mxu0 0
    %1382 = vmatpush1.bf16.msra.mxu0 %v1176
    %1383 = vmatprep.subr.bf16.mxu0 0
    %1384 = vmatpush1.bf16.msra.mxu0 %v1177
    %1385 = vmatprep.subr.bf16.mxu0 0
    %1386 = vmatpush1.bf16.msra.mxu0 %v1178
    %1387 = vmatprep.subr.bf16.mxu0 0
    %1388 = vmatpush1.bf16.msra.mxu0 %v1179
    %1389 = vmatprep.subr.bf16.mxu0 0
    %1390 = vmatpush1.bf16.msra.mxu0 %v1180
    %1391 = vmatprep.subr.bf16.mxu0 0
    %1392 = vmatpush1.bf16.msra.mxu0 %v1181
    %1393 = vmatprep.subr.bf16.mxu0 0
    %1394 = vmatpush1.bf16.msra.mxu0 %v1182
    %1395 = vmatprep.subr.bf16.mxu0 0
    %1396 = vmatpush1.bf16.msra.mxu0 %v1183
    %1397 = vmatprep.subr.bf16.mxu0 0
    %1398 = vmatpush1.bf16.msra.mxu0 %v1184
    %1399 = vmatprep.subr.bf16.mxu0 0
    %1400 = vmatpush1.bf16.msra.mxu0 %v1185
    %1401 = vmatprep.subr.bf16.mxu0 0
    %1402 = vmatpush1.bf16.msra.mxu0 %v1186
    %1403 = vmatprep.mubr.bf16.mxu0 %v731
    %1404 = vmatmul.mubr.bf16.gmra.mrb[0].mxu0 %v730
    %v1405 = vpop.f32.mrb[0].mxu0
    %v1406 = vadd.f32 %v1366, %v1405
    %v1407 = vpop.f32.mrb[0].mxu0
    %v1408 = vpop.f32.mrb[0].mxu0
    %v1409 = vpop.f32.mrb[0].mxu0
    %1410 = vdwg.mxu0
    %v1411 = vmul.f32 %v1406, 0.5
    %v1412 = vmul.f32 %v1406, 0.70710677
    %v1413 = verf.f32.pop %v1412
    %v1414 = vadd.f32 %v1413, 1.0
    %v1415 = vmul.f32 %v1411, %v1414
    %v1416 = vpack.c.bf16 %v1415, %v1415
    %v1417 = vld [vmem:[#allocation10] sm:$0xf]
    %v1418 = vld [vmem:[#allocation10 + $0x4] sm:$0xf]
    %v1419 = vld [vmem:[#allocation10 + $0x8] sm:$0xf]
    %v1420 = vld [vmem:[#allocation10 + $0xc] sm:$0xf]
    %v1421 = vld [vmem:[#allocation10 + $0x10] sm:$0xf]
    %v1422 = vld [vmem:[#allocation10 + $0x14] sm:$0xf]
    %v1423 = vld [vmem:[#allocation10 + $0x18] sm:$0xf]
    %v1424 = vld [vmem:[#allocation10 + $0x1c] sm:$0xf]
    %v1425 = vld [vmem:[#allocation10 + $0x20] sm:$0xf]
    %v1426 = vld [vmem:[#allocation10 + $0x24] sm:$0xf]
    %v1427 = vld [vmem:[#allocation10 + $0x28] sm:$0xf]
    %v1428 = vld [vmem:[#allocation10 + $0x2c] sm:$0xf]
    %v1429 = vld [vmem:[#allocation10 + $0x30] sm:$0xf]
    %v1430 = vld [vmem:[#allocation10 + $0x34] sm:$0xf]
    %v1431 = vld [vmem:[#allocation10 + $0x38] sm:$0xf]
    %v1432 = vld [vmem:[#allocation10 + $0x3c] sm:$0xf]
    %v1433 = vld [vmem:[%s6] sm:$0x1]
    %v1435 = vlaneseq
    %v1436 = vshrl.u32 %v1435, 7
    %v1437 = vsub.s32 0, %v1436
    %v1438 = vrot.slane %v1433, %v1437
    %v1456 = vunpack.c.l.b16 %v1417
    %v1457 = vunpack.c.l.b16 %v1418
    %v1458 = vunpack.c.l.b16 %v1419
    %v1459 = vunpack.c.l.b16 %v1420
    %v1460 = vunpack.c.l.b16 %v1421
    %v1461 = vunpack.c.l.b16 %v1422
    %v1462 = vunpack.c.l.b16 %v1423
    %v1463 = vunpack.c.l.b16 %v1424
    %v1464 = vunpack.c.l.b16 %v1425
    %v1465 = vunpack.c.l.b16 %v1426
    %v1466 = vunpack.c.l.b16 %v1427
    %v1467 = vunpack.c.l.b16 %v1428
    %v1468 = vunpack.c.l.b16 %v1429
    %v1469 = vunpack.c.l.b16 %v1430
    %v1470 = vunpack.c.l.b16 %v1431
    %v1471 = vunpack.c.l.b16 %v1432
    %v1472 = vpack.c.b16 %v1457, %v1456
    %v1473 = vpack.c.b16 %v1459, %v1458
    %v1474 = vpack.c.b16 %v1461, %v1460
    %v1475 = vpack.c.b16 %v1463, %v1462
    %v1476 = vpack.c.b16 %v1465, %v1464
    %v1477 = vpack.c.b16 %v1467, %v1466
    %v1478 = vpack.c.b16 %v1469, %v1468
    %v1479 = vpack.c.b16 %v1471, %v1470
    %1488 = vmatprep.subr.bf16.mxu0 0
    %1489 = vmatpush1.bf16.msra.mxu0 %v1472
    %1490 = vmatprep.subr.bf16.mxu0 0
    %1491 = vmatpush1.bf16.msra.mxu0 %v1473
    %1492 = vmatprep.subr.bf16.mxu0 0
    %1493 = vmatpush1.bf16.msra.mxu0 %v1474
    %1494 = vmatprep.subr.bf16.mxu0 0
    %1495 = vmatpush1.bf16.msra.mxu0 %v1475
    %1496 = vmatprep.subr.bf16.mxu0 0
    %1497 = vmatpush1.bf16.msra.mxu0 %v1476
    %1498 = vmatprep.subr.bf16.mxu0 0
    %1499 = vmatpush1.bf16.msra.mxu0 %v1477
    %1500 = vmatprep.subr.bf16.mxu0 0
    %1501 = vmatpush1.bf16.msra.mxu0 %v1478
    %1502 = vmatprep.subr.bf16.mxu0 0
    %1503 = vmatpush1.bf16.msra.mxu0 %v1479
    %1504 = vmatprep.subr.bf16.mxu0 0
    %1505 = vmatpush1.bf16.msra.mxu0 0
    %1506 = vmatprep.subr.bf16.mxu0 0
    %1507 = vmatpush1.bf16.msra.mxu0 0
    %1508 = vmatprep.subr.bf16.mxu0 0
    %1509 = vmatpush1.bf16.msra.mxu0 0
    %1510 = vmatprep.subr.bf16.mxu0 0
    %1511 = vmatpush1.bf16.msra.mxu0 0
    %1512 = vmatprep.subr.bf16.mxu0 0
    %1513 = vmatpush1.bf16.msra.mxu0 0
    %1514 = vmatprep.subr.bf16.mxu0 0
    %1515 = vmatpush1.bf16.msra.mxu0 0
    %1516 = vmatprep.subr.bf16.mxu0 0
    %1517 = vmatpush1.bf16.msra.mxu0 0
    %1518 = vmatprep.subr.bf16.mxu0 0
    %1519 = vmatpush1.bf16.msra.mxu0 0
    %1520 = vmatprep.mubr.bf16.mxu0 0
    %1521 = vmatmul.mubr.bf16.gmra.mrb[0].mxu0 %v1416
    %v1522 = vpop.f32.mrb[0].mxu0
    %v1523 = vadd.f32 %v1438, %v1522
    %v1524 = vpop.f32.mrb[0].mxu0
    %v1525 = vpop.f32.mrb[0].mxu0
    %v1526 = vpop.f32.mrb[0].mxu0
    %1527 = vdwg.mxu0
    %1528 = vst [vmem:[#allocation11] sm:$0xff] %v1523
    // Predicated region
    $region50: #{tpu_custom_call.1} parent=1 // pred_check
      _
    $region51: #{tpu_custom_call.1} parent=1 // pred_check_branch
      %1530 = sbr.rel (0) target = $region53
    $region52: #{tpu_custom_call.1} parent=1 // pred_region
      %s1532 = ssub.s32 128, 128
      %1533 = vsyncadd [#allocation4], %s1532
      %s1535 = sshll.u32 [#allocation11], 4
      %s1536 = int_to_ptr.vmem [resolvable:$true] %s1535
      %1538 = dma.vmem_to_hbm [thread:$0]  %s1536, 128, %s7, [#allocation4]
    $region53: #{tpu_custom_call.1} parent=1 // pred_fallthru
      _
    // Predicated region
    $region54: #{tpu_custom_call.1} parent=1 // pred_check
      _
    $region55: #{tpu_custom_call.1} parent=1 // pred_check_branch
      %1540 = sbr.rel (0) target = $region57
    $region56: #{tpu_custom_call.1} parent=1 // pred_region
      %1541 = dma.done [#allocation4], 128
    $region57: #{tpu_custom_call.1} parent=1 // pred_fallthru
      _
    %1542 = vsyncpa [#allocation3], 1
    %1543 = vsyncpa [#allocation6], 1
    %1544 = vsyncpa [#allocation9], 1
    %1545 = vsyncpa [#allocation4], 1

</llo_original>
